<compile_context>
chip_gen: v7x
topology: tpu7x:2x2x1
jax: 0.10.0
libtpu: 0.0.40
codegen_flags: <defaults>
</compile_context>

<pallas_src>
import functools
import math

import numpy as np
import jax
import jax.numpy as jnp
from jax import lax
from jax.experimental import pallas as pl
from jax.experimental.pallas import tpu as pltpu

CONFIG = dict(num_head=4, head_dim=128, k=8, max_seq_len=512, seq_mode="bottom-up")


def _round_up(x, m):
    return ((x + m - 1) // m) * m


# ----------------------------------------------------------------------------
# Static tree bookkeeping (identical formulas to SequoiaAttention.forward)
# ----------------------------------------------------------------------------
def build_levels(n, k):
    L = math.ceil(math.log(n) / math.log(k)) + 1
    rel = [0] + [math.ceil(n / k ** i) for i in range(L)]
    Lind = [int(x) for x in np.cumsum(np.array(rel))]
    return L, rel, Lind


def get_selectors(l, k, L, rel, Lind):
    """Replicates get_selectors() for the mask=True branch.  Returns int32 arrays."""
    m = rel[l + 1]
    queries = range(m)
    ancestors, children = None, None

    if l < L - 1:
        def get_ancestor(j, i):
            if (j + 1) / rel[l + 2] <= i / rel[l + 1]:
                return Lind[l + 1] + j
            return 0
        ancestors = np.array(
            [[get_ancestor(j, i) for j in range(rel[l + 2])] for i in queries],
            dtype=np.int32)

    def get_sibling(sib, i):
        r = min(i // k * k + sib, rel[l + 1] - 1)
        return Lind[l] + r if r / rel[l + 1] <= i / rel[l + 1] else 0
    siblings = np.array(
        [[get_sibling(s, i) for s in range(k)] for i in queries], dtype=np.int32)

    if l >= 1:
        def get_child(c, i):
            r = min(i * k + c, rel[l] - 1)
            return Lind[l - 1] + r if r / rel[l] <= i / rel[l + 1] else 0
        children = np.array(
            [[get_child(c, i) for c in range(k)] for i in queries], dtype=np.int32)

    return ancestors, siblings, children


def build_plan(n, k):
    """Static slot layout + per-group multiplicity-count table (numpy)."""
    L, rel, Lind = build_levels(n, k)
    n_tot = Lind[-1]
    max_m = max(rel[1:])
    TM = min(128, _round_up(max_m, 8))          # query tile (sublane-aligned)

    level_start_step = []
    s_acc = 0
    for l in range(L):                          # seq_mode == 'bottom-up'
        level_start_step.append(s_acc)
        s_acc += -(-rel[l + 1] // TM)           # ceil(m / TM) steps for this level
    S = s_acc
    NS = S * TM                                 # total slot rows (multiple of 8)
    NP = _round_up(NS, 128)                     # key/lane axis (multiple of 128)

    # natural token index -> slot index (each level's rows padded up to its steps)
    slot_of = np.zeros(n_tot, dtype=np.int32)
    for l in range(L):
        m = rel[l + 1]
        base = level_start_step[l] * TM
        slot_of[Lind[l]:Lind[l] + m] = base + np.arange(m, dtype=np.int32)

    nat_of_slot = np.zeros(NP, dtype=np.int32)
    valid = np.zeros(NP, dtype=bool)
    nat_of_slot[slot_of] = np.arange(n_tot, dtype=np.int32)
    valid[slot_of] = True

    # per-group selector multiplicity counts in slot coordinates (densely packed)
    counts = np.zeros((3, NS, NP), dtype=np.float32)
    G_used = 1
    for l in range(L):
        m = rel[l + 1]
        base = level_start_step[l] * TM
        anc, sib, chd = get_selectors(l, k, L, rel, Lind)
        sels = [sel for sel in (anc, sib, chd) if sel is not None]
        G_used = max(G_used, len(sels))
        for g, sel in enumerate(sels):
            rows = base + np.repeat(np.arange(m, dtype=np.int64), sel.shape[1])
            cols = slot_of[sel.reshape(-1)]
            np.add.at(counts[g], (rows, cols), 1.0)
    counts = counts[:G_used]

    return dict(L=L, rel=rel, Lind=Lind, n_tot=n_tot, TM=TM, S=S, NS=NS, NP=NP,
                level_starts=tuple(level_start_step), G_used=G_used,
                slot_of=slot_of, nat_of_slot=nat_of_slot, valid=valid, counts=counts)


# ----------------------------------------------------------------------------
# Fused Pallas kernel: whole forward pass, one (head, step) per grid point
# ----------------------------------------------------------------------------
def _fused_kernel(counts_ref, q_ref, k_ref, vin_ref, out_ref, vbase_ref,
                  *, TM, level_starts, num_groups):
    # counts_ref: (G, NS, NP) bf16, whole-array VMEM resident
    # q_ref: (TM, d) bf16 (pre-scaled) ; k_ref / vin_ref / out_ref / vbase_ref: (NP, d) bf16
    s = pl.program_id(1)

    @pl.when(s == 0)
    def _init():
        out_ref[...] = vin_ref[...]             # working V (written back once per head)
        vbase_ref[...] = vin_ref[...]           # V snapshot at start of current level

    if len(level_starts) > 1:                   # refresh snapshot at each new level
        cond = s == level_starts[1]
        for ls in level_starts[2:]:
            cond = jnp.logical_or(cond, s == ls)

        @pl.when(cond)
        def _snapshot():
            vbase_ref[...] = out_ref[...]

    # scores = (Q/sqrt(d)) @ K^T  -- one bf16 MXU matmul, f32 accumulation
    scores = lax.dot_general(q_ref[...], k_ref[...], (((1,), (1,)), ((), ())),
                             preferred_element_type=jnp.float32)        # (TM, NP)
    e = jnp.exp(scores - jnp.max(scores, axis=-1, keepdims=True))       # shared exp

    row0 = pl.multiple_of(s * TM, 8)
    acc = None
    for g in range(num_groups):                 # static unroll (<= 3 groups)
        cnt = counts_ref[g, pl.ds(row0, TM), :].astype(jnp.float32)     # (TM, NP)
        num = cnt * e
        den = jnp.sum(num, axis=-1, keepdims=True)
        inv = pl.reciprocal(jnp.maximum(den, 1e-30), approx=True) * (1.0 / 3.0)
        term = num * inv
        acc = term if acc is None else acc + term

    w = acc.astype(jnp.bfloat16)
    out = jnp.dot(w, vbase_ref[...], preferred_element_type=jnp.float32)  # (TM, d)
    out_ref[pl.ds(row0, TM), :] = out.astype(out_ref.dtype)


# ----------------------------------------------------------------------------
# Full forward pass
# ----------------------------------------------------------------------------
def sequoia_attention(Q, K, V, n, config=CONFIG):
    b, h, n_tot, d = Q.shape
    k = config["k"]
    assert h == config["num_head"] and d == config["head_dim"]

    plan = build_plan(n, k)
    assert n_tot == plan["n_tot"]
    TM, S, NS, NP = plan["TM"], plan["S"], plan["NS"], plan["NP"]
    level_starts, G_used = plan["level_starts"], plan["G_used"]
    scale = 1.0 / (d ** 0.5)

    counts = jnp.asarray(plan["counts"], dtype=jnp.bfloat16)
    nat_of_slot = jnp.asarray(plan["nat_of_slot"])
    valid = jnp.asarray(plan["valid"])
    slot_of = jnp.asarray(plan["slot_of"])

    kern = functools.partial(_fused_kernel, TM=TM, level_starts=level_starts,
                             num_groups=G_used)

    @jax.jit
    def run(Q, K, V, counts):
        BH = b * h
        Qf = Q.reshape(BH, n_tot, d).astype(jnp.float32) * scale  # fold 1/sqrt(d)
        Kf = K.reshape(BH, n_tot, d)
        Vf = V.reshape(BH, n_tot, d)

        def to_slots(x, rows):                  # natural -> slot layout, bf16, zero-padded
            xs = jnp.take(x, nat_of_slot[:rows], axis=1)
            xs = jnp.where(valid[:rows][None, :, None], xs, 0.0)
            return xs.astype(jnp.bfloat16)

        Qs = to_slots(Qf, NS)                   # (BH, NS, d)
        Ks = to_slots(Kf, NP)                   # (BH, NP, d)
        Vs = to_slots(Vf, NP)                   # (BH, NP, d)

        out_slots = pl.pallas_call(
            kern,
            out_shape=jax.ShapeDtypeStruct((BH, NP, d), jnp.bfloat16),
            grid=(BH, S),
            in_specs=[
                # count table: whole array, VMEM-resident (fetched once, never re-DMA'd)
                pl.BlockSpec(memory_space=pltpu.MemorySpace.VMEM),
                pl.BlockSpec((None, TM, d), lambda i, s_: (i, s_, 0)),   # Q tile
                pl.BlockSpec((None, NP, d), lambda i, s_: (i, 0, 0)),    # K (resident per head)
                pl.BlockSpec((None, NP, d), lambda i, s_: (i, 0, 0)),    # V init (read once per head)
            ],
            out_specs=pl.BlockSpec((None, NP, d), lambda i, s_: (i, 0, 0)),  # working V
            scratch_shapes=[pltpu.VMEM((NP, d), jnp.bfloat16)],              # level snapshot
            compiler_params=pltpu.CompilerParams(
                dimension_semantics=("parallel", "arbitrary")),
        )(counts, Qs, Ks, Vs)

        out_nat = jnp.take(out_slots, slot_of, axis=1)            # back to natural layout
        return out_nat.reshape(b, h, n_tot, d).astype(V.dtype)

    # TODO(synk): drop_attn (attention dropout) is constructed in __init__ but never
    # applied in the reference forward pass, so it is intentionally omitted.
    return run(Q, K, V, counts)


# ----------------------------------------------------------------------------
# Pure-numpy reference (mirror of the PyTorch code) for verification
# ----------------------------------------------------------------------------
def reference_numpy(Q, K, V, n, k, d):
    V = V.copy()
    L, rel, Lind = build_levels(n, k)
    for l in range(L):
        anc, sib, chd = get_selectors(l, k, L, rel, Lind)
        lo, hi = Lind[l], Lind[l + 1]
        q = Q[:, :, lo:hi, :]
        out = np.zeros_like(q)
        for sel in (anc, sib, chd):
            if sel is None:
                continue
            keys = K[:, :, sel, :]
            vals = V[:, :, sel, :]
            sc = np.einsum("bhnd,bhnkd->bhnk", q, keys) / d ** 0.5
            sc = sc - sc.max(-1, keepdims=True)
            e = np.exp(sc)
            w = e / e.sum(-1, keepdims=True)
            out = out + np.einsum("bhnk,bhnkd->bhnd", w, vals)
        V[:, :, lo:hi, :] = out / 3.0
    return V


# ----------------------------------------------------------------------------
if __name__ == "__main__":
    b = 2
    h, d, k = CONFIG["num_head"], CONFIG["head_dim"], CONFIG["k"]

    # n=50 : single-tile bottom level.  n=200 : bottom level spans 2 query tiles,
    # exercising the in-kernel per-level V snapshot path.
    for n in (50, 200):
        L, rel, Lind = build_levels(n, k)
        n_tot = Lind[-1]

        key = jax.random.PRNGKey(0)
        kq, kk_, kv = jax.random.split(key, 3)
        Q = jax.random.normal(kq, (b, h, n_tot, d), dtype=jnp.float32)
        K = jax.random.normal(kk_, (b, h, n_tot, d), dtype=jnp.float32)
        V = jax.random.normal(kv, (b, h, n_tot, d), dtype=jnp.float32)

        out = jax.block_until_ready(sequoia_attention(Q, K, V, n))

        ref = reference_numpy(np.array(Q), np.array(K), np.array(V), n, k, d)
        max_err = np.max(np.abs(np.array(out) - ref))
        # bf16 MXU matmuls + bf16 V write-back chain + approx reciprocal
        assert np.allclose(np.array(out), ref, atol=6e-2, rtol=6e-2), \
            f"n={n} mismatch: {max_err}"

    print("KERNEL_OK")
</pallas_src>

<mosaic_0001>
module attributes {stable_mosaic.version = 11 : i64} {
  func.func @_fused_kernel(%arg0: i32, %arg1: i32, %arg2: memref<3x168x256xbf16, #tpu.memory_space<vmem>>, %arg3: memref<1x56x128xbf16, #tpu.memory_space<vmem>>, %arg4: memref<1x256x128xbf16, #tpu.memory_space<vmem>>, %arg5: memref<1x256x128xbf16, #tpu.memory_space<vmem>>, %arg6: memref<1x256x128xbf16, #tpu.memory_space<vmem>>, %arg7: memref<256x128xbf16, #tpu.memory_space<vmem>>) attributes {dimension_semantics = [#tpu.dimension_semantics<parallel>, #tpu.dimension_semantics<arbitrary>], iteration_bounds = array<i64: 8, 3>, scalar_prefetch = 0 : i64, scratch_operands = 1 : i64, tpu.core_type = #tpu.core_type<tc>, window_params = [{pipeline_mode = #tpu.pipeline_mode<synchronous>, transform_indices = @transform_0, window_bounds = array<i64: 3, 168, 256>}, {transform_indices = @transform_1, window_bounds = array<i64: 1, 56, 128>}, {transform_indices = @transform_2, window_bounds = array<i64: 1, 256, 128>}, {transform_indices = @transform_3, window_bounds = array<i64: 1, 256, 128>}, {transform_indices = @transform_4, window_bounds = array<i64: 1, 256, 128>}]} {
    %c0_i32 = arith.constant 0 : i32
    %0 = arith.cmpi eq, %arg1, %c0_i32 : i32
    %1 = arith.extui %0 : i1 to i32
    %c0_i32_0 = arith.constant 0 : i32
    %2 = arith.cmpi ne, %1, %c0_i32_0 : i32
    scf.if %2 {
      %c0_26 = arith.constant 0 : index
      %c0_27 = arith.constant 0 : index
      %c0_28 = arith.constant 0 : index
      %72 = vector.load %arg5[%c0_26, %c0_27, %c0_28] : memref<1x256x128xbf16, #tpu.memory_space<vmem>>, vector<1x256x128xbf16>
      %73 = vector.shape_cast %72 : vector<1x256x128xbf16> to vector<256x128xbf16>
      %c0_29 = arith.constant 0 : index
      %c0_30 = arith.constant 0 : index
      %c0_31 = arith.constant 0 : index
      %74 = vector.load %arg6[%c0_29, %c0_30, %c0_31] : memref<1x256x128xbf16, #tpu.memory_space<vmem>>, vector<1x256x128xbf16>
      %75 = vector.shape_cast %74 : vector<1x256x128xbf16> to vector<256x128xbf16>
      %76 = vector.shape_cast %73 : vector<256x128xbf16> to vector<1x256x128xbf16>
      tpu.vector_store %arg6[%c0_29, %c0_30, %c0_31], %76 {strides = array<i32>} : memref<1x256x128xbf16, #tpu.memory_space<vmem>>, vector<1x256x128xbf16>,
      %c0_32 = arith.constant 0 : index
      %c0_33 = arith.constant 0 : index
      %c0_34 = arith.constant 0 : index
      %77 = vector.load %arg5[%c0_32, %c0_33, %c0_34] : memref<1x256x128xbf16, #tpu.memory_space<vmem>>, vector<1x256x128xbf16>
      %78 = vector.shape_cast %77 : vector<1x256x128xbf16> to vector<256x128xbf16>
      %c0_35 = arith.constant 0 : index
      %c0_36 = arith.constant 0 : index
      %79 = vector.load %arg7[%c0_35, %c0_36] : memref<256x128xbf16, #tpu.memory_space<vmem>>, vector<256x128xbf16>
      tpu.vector_store %arg7[%c0_35, %c0_36], %78 {strides = array<i32>} : memref<256x128xbf16, #tpu.memory_space<vmem>>, vector<256x128xbf16>,
    } else {
    }
    %c1_i32 = arith.constant 1 : i32
    %3 = arith.cmpi eq, %arg1, %c1_i32 : i32
    %c2_i32 = arith.constant 2 : i32
    %4 = arith.cmpi eq, %arg1, %c2_i32 : i32
    %5 = arith.ori %3, %4 : i1
    %6 = arith.extui %5 : i1 to i32
    %c0_i32_1 = arith.constant 0 : i32
    %7 = arith.cmpi ne, %6, %c0_i32_1 : i32
    scf.if %7 {
      %c0_26 = arith.constant 0 : index
      %c0_27 = arith.constant 0 : index
      %c0_28 = arith.constant 0 : index
      %72 = vector.load %arg6[%c0_26, %c0_27, %c0_28] : memref<1x256x128xbf16, #tpu.memory_space<vmem>>, vector<1x256x128xbf16>
      %73 = vector.shape_cast %72 : vector<1x256x128xbf16> to vector<256x128xbf16>
      %c0_29 = arith.constant 0 : index
      %c0_30 = arith.constant 0 : index
      %74 = vector.load %arg7[%c0_29, %c0_30] : memref<256x128xbf16, #tpu.memory_space<vmem>>, vector<256x128xbf16>
      tpu.vector_store %arg7[%c0_29, %c0_30], %73 {strides = array<i32>} : memref<256x128xbf16, #tpu.memory_space<vmem>>, vector<256x128xbf16>,
    } else {
    }
    %c0 = arith.constant 0 : index
    %c0_2 = arith.constant 0 : index
    %c0_3 = arith.constant 0 : index
    %8 = vector.load %arg3[%c0, %c0_2, %c0_3] : memref<1x56x128xbf16, #tpu.memory_space<vmem>>, vector<1x56x128xbf16>
    %9 = vector.shape_cast %8 : vector<1x56x128xbf16> to vector<56x128xbf16>
    %c0_4 = arith.constant 0 : index
    %c0_5 = arith.constant 0 : index
    %c0_6 = arith.constant 0 : index
    %10 = vector.load %arg4[%c0_4, %c0_5, %c0_6] : memref<1x256x128xbf16, #tpu.memory_space<vmem>>, vector<1x256x128xbf16>
    %11 = vector.shape_cast %10 : vector<1x256x128xbf16> to vector<256x128xbf16>
    %cst = arith.constant dense<0.000000e+00> : vector<56x256xf32>
    %12 = tpu.matmul %9, %11, %cst {dimension_numbers = #tpu.dot_dimension_numbers<[1], [1], [0], [0], [0, 0, 1, 0], [], []>} : vector<56x128xbf16>, vector<256x128xbf16>, vector<56x256xf32> -> vector<56x256xf32>
    %cst_7 = arith.constant dense<0xFF800000> : vector<56xf32>
    %13 = vector.multi_reduction <maximumf>, %12, %cst_7 [1] : vector<56x256xf32> to vector<56xf32>
    %14 = vector.shape_cast %13 : vector<56xf32> to vector<56x1xf32>
    %15 = vector.broadcast %14 : vector<56x1xf32> to vector<56x256xf32>
    %16 = arith.subf %12, %15 : vector<56x256xf32>
    %17 = math.exp %16 : vector<56x256xf32>
    %c56_i32 = arith.constant 56 : i32
    %18 = arith.muli %arg1, %c56_i32 : i32
    %19 = tpu.assume_multiple %18, 8 : i32
    %c0_8 = arith.constant 0 : index
    %20 = arith.index_cast %19 : i32 to index
    %c0_9 = arith.constant 0 : index
    %21 = vector.load %arg2[%c0_8, %20, %c0_9] : memref<3x168x256xbf16, #tpu.memory_space<vmem>>, vector<1x56x256xbf16>
    %22 = vector.shape_cast %21 : vector<1x56x256xbf16> to vector<56x256xbf16>
    %23 = arith.extf %22 : vector<56x256xbf16> to vector<56x256xf32>
    %24 = arith.mulf %23, %17 : vector<56x256xf32>
    %cst_10 = arith.constant dense<0.000000e+00> : vector<56xf32>
    %25 = vector.multi_reduction <add>, %24, %cst_10 [1] : vector<56x256xf32> to vector<56xf32>
    %26 = vector.shape_cast %25 : vector<56xf32> to vector<56x1xf32>
    %cst_11 = arith.constant 1.000000e-30 : f32
    %27 = vector.broadcast %cst_11 : f32 to vector<56x1xf32>
    %28 = arith.maximumf %26, %27 : vector<56x1xf32>
    %29 = tpu.reciprocal %28 {approx = true} : vector<56x1xf32> -> vector<56x1xf32>
    %cst_12 = arith.constant 0.333333343 : f32
    %30 = vector.broadcast %cst_12 : f32 to vector<56x1xf32>
    %31 = arith.mulf %29, %30 : vector<56x1xf32>
    %32 = vector.broadcast %31 : vector<56x1xf32> to vector<56x256xf32>
    %33 = arith.mulf %24, %32 : vector<56x256xf32>
    %c1 = arith.constant 1 : index
    %34 = arith.index_cast %19 : i32 to index
    %c0_13 = arith.constant 0 : index
    %35 = vector.load %arg2[%c1, %34, %c0_13] : memref<3x168x256xbf16, #tpu.memory_space<vmem>>, vector<1x56x256xbf16>
    %36 = vector.shape_cast %35 : vector<1x56x256xbf16> to vector<56x256xbf16>
    %37 = arith.extf %36 : vector<56x256xbf16> to vector<56x256xf32>
    %38 = arith.mulf %37, %17 : vector<56x256xf32>
    %cst_14 = arith.constant dense<0.000000e+00> : vector<56xf32>
    %39 = vector.multi_reduction <add>, %38, %cst_14 [1] : vector<56x256xf32> to vector<56xf32>
    %40 = vector.shape_cast %39 : vector<56xf32> to vector<56x1xf32>
    %cst_15 = arith.constant 1.000000e-30 : f32
    %41 = vector.broadcast %cst_15 : f32 to vector<56x1xf32>
    %42 = arith.maximumf %40, %41 : vector<56x1xf32>
    %43 = tpu.reciprocal %42 {approx = true} : vector<56x1xf32> -> vector<56x1xf32>
    %cst_16 = arith.constant 0.333333343 : f32
    %44 = vector.broadcast %cst_16 : f32 to vector<56x1xf32>
    %45 = arith.mulf %43, %44 : vector<56x1xf32>
    %46 = vector.broadcast %45 : vector<56x1xf32> to vector<56x256xf32>
    %47 = arith.mulf %38, %46 : vector<56x256xf32>
    %48 = arith.addf %33, %47 : vector<56x256xf32>
    %c2 = arith.constant 2 : index
    %49 = arith.index_cast %19 : i32 to index
    %c0_17 = arith.constant 0 : index
    %50 = vector.load %arg2[%c2, %49, %c0_17] : memref<3x168x256xbf16, #tpu.memory_space<vmem>>, vector<1x56x256xbf16>
    %51 = vector.shape_cast %50 : vector<1x56x256xbf16> to vector<56x256xbf16>
    %52 = arith.extf %51 : vector<56x256xbf16> to vector<56x256xf32>
    %53 = arith.mulf %52, %17 : vector<56x256xf32>
    %cst_18 = arith.constant dense<0.000000e+00> : vector<56xf32>
    %54 = vector.multi_reduction <add>, %53, %cst_18 [1] : vector<56x256xf32> to vector<56xf32>
    %55 = vector.shape_cast %54 : vector<56xf32> to vector<56x1xf32>
    %cst_19 = arith.constant 1.000000e-30 : f32
    %56 = vector.broadcast %cst_19 : f32 to vector<56x1xf32>
    %57 = arith.maximumf %55, %56 : vector<56x1xf32>
    %58 = tpu.reciprocal %57 {approx = true} : vector<56x1xf32> -> vector<56x1xf32>
    %cst_20 = arith.constant 0.333333343 : f32
    %59 = vector.broadcast %cst_20 : f32 to vector<56x1xf32>
    %60 = arith.mulf %58, %59 : vector<56x1xf32>
    %61 = vector.broadcast %60 : vector<56x1xf32> to vector<56x256xf32>
    %62 = arith.mulf %53, %61 : vector<56x256xf32>
    %63 = arith.addf %48, %62 : vector<56x256xf32>
    %64 = arith.truncf %63 : vector<56x256xf32> to vector<56x256xbf16>
    %c0_21 = arith.constant 0 : index
    %c0_22 = arith.constant 0 : index
    %65 = vector.load %arg7[%c0_21, %c0_22] : memref<256x128xbf16, #tpu.memory_space<vmem>>, vector<256x128xbf16>
    %cst_23 = arith.constant dense<0.000000e+00> : vector<56x128xf32>
    %66 = tpu.matmul %64, %65, %cst_23 {dimension_numbers = #tpu.dot_dimension_numbers<[1], [0], [0], [1], [0, 0, 1, 1], [], []>} : vector<56x256xbf16>, vector<256x128xbf16>, vector<56x128xf32> -> vector<56x128xf32>
    %67 = arith.truncf %66 : vector<56x128xf32> to vector<56x128xbf16>
    %c0_24 = arith.constant 0 : index
    %68 = arith.index_cast %19 : i32 to index
    %c0_25 = arith.constant 0 : index
    %69 = vector.load %arg6[%c0_24, %68, %c0_25] : memref<1x256x128xbf16, #tpu.memory_space<vmem>>, vector<1x56x128xbf16>
    %70 = vector.shape_cast %69 : vector<1x56x128xbf16> to vector<56x128xbf16>
    %71 = vector.shape_cast %67 : vector<56x128xbf16> to vector<1x56x128xbf16>
    tpu.vector_store %arg6[%c0_24, %68, %c0_25], %71 {strides = array<i32>} : memref<1x256x128xbf16, #tpu.memory_space<vmem>>, vector<1x56x128xbf16>,
    return
  }
  func.func @transform_0(%arg0: i32, %arg1: i32) -> (i32, i32, i32) {
    %c0_i32 = arith.constant 0 : i32
    %c0_i32_0 = arith.constant 0 : i32
    %c0_i32_1 = arith.constant 0 : i32
    %c0_i32_2 = arith.constant 0 : i32
    return %c0_i32, %c0_i32_0, %c0_i32_1 : i32, i32, i32
  }
  func.func @transform_1(%arg0: i32, %arg1: i32) -> (i32, i32, i32) {
    %c0_i32 = arith.constant 0 : i32
    %c0_i32_0 = arith.constant 0 : i32
    return %arg0, %arg1, %c0_i32 : i32, i32, i32
  }
  func.func @transform_2(%arg0: i32, %arg1: i32) -> (i32, i32, i32) {
    %c0_i32 = arith.constant 0 : i32
    %c0_i32_0 = arith.constant 0 : i32
    %c0_i32_1 = arith.constant 0 : i32
    return %arg0, %c0_i32, %c0_i32_0 : i32, i32, i32
  }
  func.func @transform_3(%arg0: i32, %arg1: i32) -> (i32, i32, i32) {
    %c0_i32 = arith.constant 0 : i32
    %c0_i32_0 = arith.constant 0 : i32
    %c0_i32_1 = arith.constant 0 : i32
    return %arg0, %c0_i32, %c0_i32_0 : i32, i32, i32
  }
  func.func @transform_4(%arg0: i32, %arg1: i32) -> (i32, i32, i32) {
    %c0_i32 = arith.constant 0 : i32
    %c0_i32_0 = arith.constant 0 : i32
    %c0_i32_1 = arith.constant 0 : i32
    return %arg0, %c0_i32, %c0_i32_0 : i32, i32, i32
  }
}

</mosaic_0001>

<llo_original>
// kernel: run.1
$region0: #{run.1}
  #allocation0 [shape = 'u32[]', space=smem, size = 0x4, offset = 0x4, fixed_abs, tag = 'smem constant byte address 0x4 - core index']
  #allocation1 [shape = 'u32[144,128]{1,0:T(1,128)}', space=vmem, size = 0x12000, scoped, tag = 'internal scratch']
  #allocation2 [shape = 'bf16[256,128]{1,0:T(16,128)(2,1)}', space=vmem, size = 0x10000, scoped, tag = 'scratch operand']
  %s0 = inlined_call_operand.vmem [shape: bf16[3,168,256], index: 0, kind: input, shape index: {}]
  %s1 = inlined_call_operand.vmem [shape: bf16[8,168,128], index: 1, kind: input, shape index: {}]
  %s2 = inlined_call_operand.vmem [shape: bf16[8,256,128], index: 2, kind: input, shape index: {}]
  %s3 = inlined_call_operand.vmem [shape: bf16[8,256,128], index: 3, kind: input, shape index: {}]
  %s4 = inlined_call_operand.vmem [shape: bf16[8,256,128], index: 4, kind: output, shape index: {}]
  %s5 = sld [smem:[#allocation0]]
  $region57: #{run.1} parent=0
    _
  %s7 = ssub.s32 1, %s5
  %s8 = scalar_select 0, %s7, %s5
  loop: start=0, step=1, limit=26
  $region2: #{run.1} parent=0 // loop_pre_header
    _
  $region3: #{run.1} parent=0 // loop_header
    %s10 = sphi 0, %s14
    %p11 = scmp.ge.s32.totalorder %s10, 26
    %s17 = sphi 0, %s29
    %s18 = sphi 0, %s25
    %s19 = sphi 0, %s17
    %s20 = sphi 0, %s18
    %s21 = sphi 0, %s19
    %s22 = sphi 0, %s20
    %s30 = sphi 0, %s30
    %s32 = sphi 0, %s30
    %s33 = sphi 0, %s32
    %s47 = sphi 0, %s33
    %s55 = sphi 0, %s57
    %s58 = sphi 0, %s55
    %s59 = sphi 0, %s58
    %s75 = sphi 0, %s59
    %s81 = sphi 0, %s83
    %s84 = sphi 0, %s81
    %s85 = sphi 0, %s84
    %s101 = sphi 0, %s85
    %s107 = sphi 0, %s109
    %s110 = sphi 0, %s107
    %s111 = sphi 0, %s110
    %s127 = sphi 0, %s111
    %s133 = sphi 0, %s135
    %s136 = sphi 0, %s133
    %s137 = sphi 0, %s136
    %s153 = sphi 0, %s137
  $region4: #{run.1} parent=0 // loop_header_branch
    %13 = sbr.rel (%p11) target = $region8
  $region5: #{run.1} parent=0 // loop_body
    %s15 = ssub.s32 %s10, 1
    %s16 = ssub.s32 %s10, 2
    %s23 = sadd.s32 1, %s18
    %p24 = scmp.ge.s32.totalorder %s23, 3
    %s25 = scalar_select %p24, 0, %s23
    %s26 = sadd.s32 1, %s17
    %s27 = scalar_select %p24, %s26, %s17
    %p28 = scmp.ge.s32.totalorder %s27, 8
    %s29 = scalar_select %p28, 0, %s27
    %s31 = sadd.s32 %s30, 1
    %p34 = scmp.eq.s32.totalorder %s10, 23
    %p35 = scmp.ne.s32.totalorder %s30, %s32
    %p36 = scmp.eq.s32.totalorder %s10, 0
    %p37 = por %p35, %p36
    %p38 = scmp.ne.s32.totalorder %s30, %s32
    %p39 = scmp.eq.s32.totalorder %s15, 23
    %p40 = por %p38, %p39
    %p41 = scmp.ne.s32.totalorder %s32, %s33
    %p42 = scmp.eq.s32.totalorder %s15, 0
    %p43 = por %p41, %p42
    %p44 = scmp.ne.s32.totalorder %s32, %s33
    %p45 = scmp.eq.s32.totalorder %s16, 23
    %p46 = por %p44, %p45
    %p48 = scmp.ne.s32.totalorder %s33, %s47
    %p49 = scmp.eq.s32.totalorder %s16, 0
    %p50 = por %p48, %p49
    %s51 = ssub.s32 %s17, %s29
    %s52 = ssub.s32 %s18, %s25
    %s53 = sor.u32 %s51, %s52
    %p54 = scmp.eq.s32.totalorder %s53, 0
    %s56 = sadd.s32 %s55, 1
    %s57 = scalar_select %p54, %s55, %s56
    %p60 = pneg %p54
    %p61 = scmp.eq.s32.totalorder %s10, 23
    %p62 = por %p60, %p61
    %p63 = scmp.ne.s32.totalorder %s55, %s58
    %p64 = scmp.eq.s32.totalorder %s10, 0
    %p65 = por %p63, %p64
    %p66 = scmp.ne.s32.totalorder %s55, %s58
    %p67 = scmp.eq.s32.totalorder %s15, 23
    %p68 = por %p66, %p67
    %p69 = scmp.ne.s32.totalorder %s58, %s59
    %p70 = scmp.eq.s32.totalorder %s15, 0
    %p71 = por %p69, %p70
    %p72 = scmp.ne.s32.totalorder %s58, %s59
    %p73 = scmp.eq.s32.totalorder %s16, 23
    %p74 = por %p72, %p73
    %p76 = scmp.ne.s32.totalorder %s59, %s75
    %p77 = scmp.eq.s32.totalorder %s16, 0
    %p78 = por %p76, %p77
    %s79 = ssub.s32 %s17, %s29
    %p80 = scmp.eq.s32.totalorder %s79, 0
    %s82 = sadd.s32 %s81, 1
    %s83 = scalar_select %p80, %s81, %s82
    %p86 = pneg %p80
    %p87 = scmp.eq.s32.totalorder %s10, 23
    %p88 = por %p86, %p87
    %p89 = scmp.ne.s32.totalorder %s81, %s84
    %p90 = scmp.eq.s32.totalorder %s10, 0
    %p91 = por %p89, %p90
    %p92 = scmp.ne.s32.totalorder %s81, %s84
    %p93 = scmp.eq.s32.totalorder %s15, 23
    %p94 = por %p92, %p93
    %p95 = scmp.ne.s32.totalorder %s84, %s85
    %p96 = scmp.eq.s32.totalorder %s15, 0
    %p97 = por %p95, %p96
    %p98 = scmp.ne.s32.totalorder %s84, %s85
    %p99 = scmp.eq.s32.totalorder %s16, 23
    %p100 = por %p98, %p99
    %p102 = scmp.ne.s32.totalorder %s85, %s101
    %p103 = scmp.eq.s32.totalorder %s16, 0
    %p104 = por %p102, %p103
    %s105 = ssub.s32 %s17, %s29
    %p106 = scmp.eq.s32.totalorder %s105, 0
    %s108 = sadd.s32 %s107, 1
    %s109 = scalar_select %p106, %s107, %s108
    %p112 = pneg %p106
    %p113 = scmp.eq.s32.totalorder %s10, 23
    %p114 = por %p112, %p113
    %p115 = scmp.ne.s32.totalorder %s107, %s110
    %p116 = scmp.eq.s32.totalorder %s10, 0
    %p117 = por %p115, %p116
    %p118 = scmp.ne.s32.totalorder %s107, %s110
    %p119 = scmp.eq.s32.totalorder %s15, 23
    %p120 = por %p118, %p119
    %p121 = scmp.ne.s32.totalorder %s110, %s111
    %p122 = scmp.eq.s32.totalorder %s15, 0
    %p123 = por %p121, %p122
    %p124 = scmp.ne.s32.totalorder %s110, %s111
    %p125 = scmp.eq.s32.totalorder %s16, 23
    %p126 = por %p124, %p125
    %p128 = scmp.ne.s32.totalorder %s111, %s127
    %p129 = scmp.eq.s32.totalorder %s16, 0
    %p130 = por %p128, %p129
    %s131 = ssub.s32 %s17, %s29
    %p132 = scmp.eq.s32.totalorder %s131, 0
    %s134 = sadd.s32 %s133, 1
    %s135 = scalar_select %p132, %s133, %s134
    %p138 = pneg %p132
    %p139 = scmp.eq.s32.totalorder %s10, 23
    %p140 = por %p138, %p139
    %p141 = scmp.ne.s32.totalorder %s133, %s136
    %p142 = scmp.eq.s32.totalorder %s10, 0
    %p143 = por %p141, %p142
    %p144 = scmp.ne.s32.totalorder %s133, %s136
    %p145 = scmp.eq.s32.totalorder %s15, 23
    %p146 = por %p144, %p145
    %p147 = scmp.ne.s32.totalorder %s136, %s137
    %p148 = scmp.eq.s32.totalorder %s15, 0
    %p149 = por %p147, %p148
    %p150 = scmp.ne.s32.totalorder %s136, %s137
    %p151 = scmp.eq.s32.totalorder %s16, 23
    %p152 = por %p150, %p151
    %p154 = scmp.ne.s32.totalorder %s137, %s153
    %p155 = scmp.eq.s32.totalorder %s16, 0
    %p156 = por %p154, %p155
    %p157 = scmp.le.s32.totalorder 1, %s10
    %p158 = scmp.lt.s32.totalorder %s10, 25
    %p159 = pnand %p157, %p158
    %p160 = pneg %p159
    // Predicated region
    $region9: #{run.1} parent=5 // pred_check
      _
    $region10: #{run.1} parent=5 // pred_check_branch
      %162 = sbr.rel (%p159) target = $region12
    $region11: #{run.1} parent=5 // pred_region
      %s163 = ssub.s32 %s10, 1
      // Predicated region
      $region13: #{run.1} parent=11 // pred_check
        %p164 = pneg %p43
      $region14: #{run.1} parent=11 // pred_check_branch
        %166 = sbr.rel (%p164) target = $region16
      $region15: #{run.1} parent=11 // pred_region
        _
      $region16: #{run.1} parent=11 // pred_fallthru
        _
    $region12: #{run.1} parent=5 // pred_fallthru
      _
    %p167 = scmp.lt.s32.totalorder %s10, 24
    // Predicated region
    $region17: #{run.1} parent=5 // pred_check
      %p168 = pneg %p167
    $region18: #{run.1} parent=5 // pred_check_branch
      %170 = sbr.rel (%p168) target = $region20
    $region19: #{run.1} parent=5 // pred_region
      // Predicated region
      $region21: #{run.1} parent=19 // pred_check
        %p171 = pneg %p65
      $region22: #{run.1} parent=19 // pred_check_branch
        %173 = sbr.rel (%p171) target = $region24
      $region23: #{run.1} parent=19 // pred_region
        %s174 = smul.u32 7, %s18
        %p175 = scmp.lt.s32.totalorder %s17, 7
        %s176 = scalar_select %p175, %s17, 7
        %p177 = scmp.lt.s32.totalorder %s174, 20
        %s178 = scalar_select %p177, %s174, 20
        %s179 = smul.addr %s176, 21
        %s180 = sadd.s32 %s178, %s179
        %s181 = smul.addr %s180, 4
        %s182 = scalar_lea.vmem %s1, %s181
        %s183 = smul.u32 7, %s18
      $region24: #{run.1} parent=19 // pred_fallthru
        _
      // Predicated region
      $region25: #{run.1} parent=19 // pred_check
        %p184 = pneg %p91
      $region26: #{run.1} parent=19 // pred_check_branch
        %186 = sbr.rel (%p184) target = $region28
      $region27: #{run.1} parent=19 // pred_region
        %p187 = scmp.lt.s32.totalorder %s17, 7
        %s188 = scalar_select %p187, %s17, 7
        %s189 = smul.addr %s188, 32
        %s190 = smul.addr %s189, 4
        %s191 = scalar_lea.vmem %s2, %s190
      $region28: #{run.1} parent=19 // pred_fallthru
        _
      // Predicated region
      $region29: #{run.1} parent=19 // pred_check
        %p192 = pneg %p117
      $region30: #{run.1} parent=19 // pred_check_branch
        %194 = sbr.rel (%p192) target = $region32
      $region31: #{run.1} parent=19 // pred_region
        %p195 = scmp.lt.s32.totalorder %s17, 7
        %s196 = scalar_select %p195, %s17, 7
        %s197 = smul.addr %s196, 32
        %s198 = smul.addr %s197, 4
        %s199 = scalar_lea.vmem %s3, %s198
      $region32: #{run.1} parent=19 // pred_fallthru
        _
    $region20: #{run.1} parent=5 // pred_fallthru
      _
    %p200 = scmp.le.s32.totalorder 1, %s10
    %p201 = scmp.lt.s32.totalorder %s10, 25
    %p202 = pnand %p200, %p201
    %p203 = pneg %p202
    // Predicated region
    $region33: #{run.1} parent=5 // pred_check
      _
    $region34: #{run.1} parent=5 // pred_check_branch
      %205 = sbr.rel (%p202) target = $region36
    $region35: #{run.1} parent=5 // pred_region
      %s206 = ssub.s32 %s10, 1
      %p207 = pneg %p43
      %p208 = pneg %p40
      %s209 = smul.u32 7, %s20
      %p210 = scmp.lt.s32.totalorder %s19, 7
      %s211 = scalar_select %p210, %s19, 7
      %p212 = scmp.lt.s32.totalorder %s209, 20
      %s213 = scalar_select %p212, %s209, 20
      %s214 = smul.addr %s211, 21
      %s215 = sadd.s32 %s213, %s214
      %s216 = smul.addr %s215, 4
      %s217 = scalar_lea.vmem %s1, %s216
      %p218 = pneg %p71
      %p219 = pneg %p68
      %p220 = scmp.lt.s32.totalorder %s19, 7
      %s221 = scalar_select %p220, %s19, 7
      %s222 = smul.addr %s221, 32
      %s223 = smul.addr %s222, 4
      %s224 = scalar_lea.vmem %s2, %s223
      %p225 = pneg %p97
      %p226 = pneg %p94
      %p227 = scmp.lt.s32.totalorder %s19, 7
      %s228 = scalar_select %p227, %s19, 7
      %s229 = smul.addr %s228, 32
      %s230 = smul.addr %s229, 4
      %s231 = scalar_lea.vmem %s3, %s230
      %p232 = pneg %p123
      %p233 = pneg %p120
      %p234 = pneg %p149
      %p235 = pneg %p146
      %p236 = scmp.lt.s32.totalorder %s19, 7
      %s237 = scalar_select %p236, %s19, 7
      %s238 = smul.addr %s237, 32
      %s239 = smul.addr %s238, 4
      %s240 = scalar_lea.vmem %s4, %s239
      %s241 = smul.u32 7, %s20
      %p242 = scmp.lt.s32.totalorder %s19, 7
      %s243 = scalar_select %p242, %s19, 7
      %p244 = scmp.lt.s32.totalorder %s241, 20
      %s245 = scalar_select %p244, %s241, 20
      %s246 = smul.addr %s243, 21
      %s247 = sadd.s32 %s245, %s246
      %s248 = smul.addr %s247, 4
      %s249 = scalar_lea.vmem %s1, %s248
      %s250 = smul.u32 7, %s20
      %p251 = scmp.lt.s32.totalorder %s19, 7
      %s252 = scalar_select %p251, %s19, 7
      %s253 = smul.addr %s252, 32
      %s254 = smul.addr %s253, 4
      %s255 = scalar_lea.vmem %s2, %s254
      %p256 = scmp.lt.s32.totalorder %s19, 7
      %s257 = scalar_select %p256, %s19, 7
      %s258 = smul.addr %s257, 32
      %s259 = smul.addr %s258, 4
      %s260 = scalar_lea.vmem %s3, %s259
      %p261 = scmp.lt.s32.totalorder %s19, 7
      %s262 = scalar_select %p261, %s19, 7
      %s263 = smul.addr %s262, 32
      %s264 = smul.addr %s263, 4
      %s265 = scalar_lea.vmem %s4, %s264
      %p267 = scmp.eq.s32.totalorder %s20, 0
      // Predicated region
      $region37: #{run.1} parent=35 // pred_check
        %p268 = pneg %p267
      $region38: #{run.1} parent=35 // pred_check_branch
        %270 = sbr.rel (%p268) target = $region40
      $region39: #{run.1} parent=35 // pred_region
        %v271 = vld [vmem:[%s260] sm:$0xf]
        %v272 = vld [vmem:[%s260 + $0x4] sm:$0xf]
        %v273 = vld [vmem:[%s260 + $0x8] sm:$0xf]
        %v274 = vld [vmem:[%s260 + $0xc] sm:$0xf]
        %v275 = vld [vmem:[%s260 + $0x10] sm:$0xf]
        %v276 = vld [vmem:[%s260 + $0x14] sm:$0xf]
        %v277 = vld [vmem:[%s260 + $0x18] sm:$0xf]
        %v278 = vld [vmem:[%s260 + $0x1c] sm:$0xf]
        %v279 = vld [vmem:[%s260 + $0x20] sm:$0xf]
        %v280 = vld [vmem:[%s260 + $0x24] sm:$0xf]
        %v281 = vld [vmem:[%s260 + $0x28] sm:$0xf]
        %v282 = vld [vmem:[%s260 + $0x2c] sm:$0xf]
        %v283 = vld [vmem:[%s260 + $0x30] sm:$0xf]
        %v284 = vld [vmem:[%s260 + $0x34] sm:$0xf]
        %v285 = vld [vmem:[%s260 + $0x38] sm:$0xf]
        %v286 = vld [vmem:[%s260 + $0x3c] sm:$0xf]
        %v287 = vld [vmem:[%s260 + $0x40] sm:$0xf]
        %v288 = vld [vmem:[%s260 + $0x44] sm:$0xf]
        %v289 = vld [vmem:[%s260 + $0x48] sm:$0xf]
        %v290 = vld [vmem:[%s260 + $0x4c] sm:$0xf]
        %v291 = vld [vmem:[%s260 + $0x50] sm:$0xf]
        %v292 = vld [vmem:[%s260 + $0x54] sm:$0xf]
        %v293 = vld [vmem:[%s260 + $0x58] sm:$0xf]
        %v294 = vld [vmem:[%s260 + $0x5c] sm:$0xf]
        %v295 = vld [vmem:[%s260 + $0x60] sm:$0xf]
        %v296 = vld [vmem:[%s260 + $0x64] sm:$0xf]
        %v297 = vld [vmem:[%s260 + $0x68] sm:$0xf]
        %v298 = vld [vmem:[%s260 + $0x6c] sm:$0xf]
        %v299 = vld [vmem:[%s260 + $0x70] sm:$0xf]
        %v300 = vld [vmem:[%s260 + $0x74] sm:$0xf]
        %v301 = vld [vmem:[%s260 + $0x78] sm:$0xf]
        %v302 = vld [vmem:[%s260 + $0x7c] sm:$0xf]
        %303 = vst [vmem:[%s265] sm:$0xf] %v271
        %304 = vst [vmem:[%s265 + $0x4] sm:$0xf] %v272
        %305 = vst [vmem:[%s265 + $0x8] sm:$0xf] %v273
        %306 = vst [vmem:[%s265 + $0xc] sm:$0xf] %v274
        %307 = vst [vmem:[%s265 + $0x10] sm:$0xf] %v275
        %308 = vst [vmem:[%s265 + $0x14] sm:$0xf] %v276
        %309 = vst [vmem:[%s265 + $0x18] sm:$0xf] %v277
        %310 = vst [vmem:[%s265 + $0x1c] sm:$0xf] %v278
        %311 = vst [vmem:[%s265 + $0x20] sm:$0xf] %v279
        %312 = vst [vmem:[%s265 + $0x24] sm:$0xf] %v280
        %313 = vst [vmem:[%s265 + $0x28] sm:$0xf] %v281
        %314 = vst [vmem:[%s265 + $0x2c] sm:$0xf] %v282
        %315 = vst [vmem:[%s265 + $0x30] sm:$0xf] %v283
        %316 = vst [vmem:[%s265 + $0x34] sm:$0xf] %v284
        %317 = vst [vmem:[%s265 + $0x38] sm:$0xf] %v285
        %318 = vst [vmem:[%s265 + $0x3c] sm:$0xf] %v286
        %319 = vst [vmem:[%s265 + $0x40] sm:$0xf] %v287
        %320 = vst [vmem:[%s265 + $0x44] sm:$0xf] %v288
        %321 = vst [vmem:[%s265 + $0x48] sm:$0xf] %v289
        %322 = vst [vmem:[%s265 + $0x4c] sm:$0xf] %v290
        %323 = vst [vmem:[%s265 + $0x50] sm:$0xf] %v291
        %324 = vst [vmem:[%s265 + $0x54] sm:$0xf] %v292
        %325 = vst [vmem:[%s265 + $0x58] sm:$0xf] %v293
        %326 = vst [vmem:[%s265 + $0x5c] sm:$0xf] %v294
        %327 = vst [vmem:[%s265 + $0x60] sm:$0xf] %v295
        %328 = vst [vmem:[%s265 + $0x64] sm:$0xf] %v296
        %329 = vst [vmem:[%s265 + $0x68] sm:$0xf] %v297
        %330 = vst [vmem:[%s265 + $0x6c] sm:$0xf] %v298
        %331 = vst [vmem:[%s265 + $0x70] sm:$0xf] %v299
        %332 = vst [vmem:[%s265 + $0x74] sm:$0xf] %v300
        %333 = vst [vmem:[%s265 + $0x78] sm:$0xf] %v301
        %334 = vst [vmem:[%s265 + $0x7c] sm:$0xf] %v302
        %v335 = vld [vmem:[%s260] sm:$0xf]
        %v336 = vld [vmem:[%s260 + $0x4] sm:$0xf]
        %v337 = vld [vmem:[%s260 + $0x8] sm:$0xf]
        %v338 = vld [vmem:[%s260 + $0xc] sm:$0xf]
        %v339 = vld [vmem:[%s260 + $0x10] sm:$0xf]
        %v340 = vld [vmem:[%s260 + $0x14] sm:$0xf]
        %v341 = vld [vmem:[%s260 + $0x18] sm:$0xf]
        %v342 = vld [vmem:[%s260 + $0x1c] sm:$0xf]
        %v343 = vld [vmem:[%s260 + $0x20] sm:$0xf]
        %v344 = vld [vmem:[%s260 + $0x24] sm:$0xf]
        %v345 = vld [vmem:[%s260 + $0x28] sm:$0xf]
        %v346 = vld [vmem:[%s260 + $0x2c] sm:$0xf]
        %v347 = vld [vmem:[%s260 + $0x30] sm:$0xf]
        %v348 = vld [vmem:[%s260 + $0x34] sm:$0xf]
        %v349 = vld [vmem:[%s260 + $0x38] sm:$0xf]
        %v350 = vld [vmem:[%s260 + $0x3c] sm:$0xf]
        %v351 = vld [vmem:[%s260 + $0x40] sm:$0xf]
        %v352 = vld [vmem:[%s260 + $0x44] sm:$0xf]
        %v353 = vld [vmem:[%s260 + $0x48] sm:$0xf]
        %v354 = vld [vmem:[%s260 + $0x4c] sm:$0xf]
        %v355 = vld [vmem:[%s260 + $0x50] sm:$0xf]
        %v356 = vld [vmem:[%s260 + $0x54] sm:$0xf]
        %v357 = vld [vmem:[%s260 + $0x58] sm:$0xf]
        %v358 = vld [vmem:[%s260 + $0x5c] sm:$0xf]
        %v359 = vld [vmem:[%s260 + $0x60] sm:$0xf]
        %v360 = vld [vmem:[%s260 + $0x64] sm:$0xf]
        %v361 = vld [vmem:[%s260 + $0x68] sm:$0xf]
        %v362 = vld [vmem:[%s260 + $0x6c] sm:$0xf]
        %v363 = vld [vmem:[%s260 + $0x70] sm:$0xf]
        %v364 = vld [vmem:[%s260 + $0x74] sm:$0xf]
        %v365 = vld [vmem:[%s260 + $0x78] sm:$0xf]
        %v366 = vld [vmem:[%s260 + $0x7c] sm:$0xf]
        %v399 = vunpack.c.l.b16 %v335
        %v400 = vunpack.c.l.b16 %v336
        %v401 = vunpack.c.l.b16 %v337
        %v402 = vunpack.c.l.b16 %v338
        %v403 = vunpack.c.l.b16 %v339
        %v404 = vunpack.c.l.b16 %v340
        %v405 = vunpack.c.l.b16 %v341
        %v406 = vunpack.c.l.b16 %v342
        %v407 = vunpack.c.l.b16 %v343
        %v408 = vunpack.c.l.b16 %v344
        %v409 = vunpack.c.l.b16 %v345
        %v410 = vunpack.c.l.b16 %v346
        %v411 = vunpack.c.l.b16 %v347
        %v412 = vunpack.c.l.b16 %v348
        %v413 = vunpack.c.l.b16 %v349
        %v414 = vunpack.c.l.b16 %v350
        %v415 = vunpack.c.l.b16 %v351
        %v416 = vunpack.c.l.b16 %v352
        %v417 = vunpack.c.l.b16 %v353
        %v418 = vunpack.c.l.b16 %v354
        %v419 = vunpack.c.l.b16 %v355
        %v420 = vunpack.c.l.b16 %v356
        %v421 = vunpack.c.l.b16 %v357
        %v422 = vunpack.c.l.b16 %v358
        %v423 = vunpack.c.l.b16 %v359
        %v424 = vunpack.c.l.b16 %v360
        %v425 = vunpack.c.l.b16 %v361
        %v426 = vunpack.c.l.b16 %v362
        %v427 = vunpack.c.l.b16 %v363
        %v428 = vunpack.c.l.b16 %v364
        %v429 = vunpack.c.l.b16 %v365
        %v430 = vunpack.c.l.b16 %v366
        %v431 = vpack.c.b16 %v400, %v399
        %v432 = vpack.c.b16 %v402, %v401
        %v433 = vpack.c.b16 %v404, %v403
        %v434 = vpack.c.b16 %v406, %v405
        %v435 = vpack.c.b16 %v408, %v407
        %v436 = vpack.c.b16 %v410, %v409
        %v437 = vpack.c.b16 %v412, %v411
        %v438 = vpack.c.b16 %v414, %v413
        %v439 = vpack.c.b16 %v416, %v415
        %v440 = vpack.c.b16 %v418, %v417
        %v441 = vpack.c.b16 %v420, %v419
        %v442 = vpack.c.b16 %v422, %v421
        %v443 = vpack.c.b16 %v424, %v423
        %v444 = vpack.c.b16 %v426, %v425
        %v445 = vpack.c.b16 %v428, %v427
        %v446 = vpack.c.b16 %v430, %v429
        %463 = vst [vmem:[#allocation2] sm:$0xff] %v431
        %464 = vst [vmem:[#allocation2 + $0x8] sm:$0xff] %v432
        %465 = vst [vmem:[#allocation2 + $0x10] sm:$0xff] %v433
        %466 = vst [vmem:[#allocation2 + $0x18] sm:$0xff] %v434
        %467 = vst [vmem:[#allocation2 + $0x20] sm:$0xff] %v435
        %468 = vst [vmem:[#allocation2 + $0x28] sm:$0xff] %v436
        %469 = vst [vmem:[#allocation2 + $0x30] sm:$0xff] %v437
        %470 = vst [vmem:[#allocation2 + $0x38] sm:$0xff] %v438
        %471 = vst [vmem:[#allocation2 + $0x40] sm:$0xff] %v439
        %472 = vst [vmem:[#allocation2 + $0x48] sm:$0xff] %v440
        %473 = vst [vmem:[#allocation2 + $0x50] sm:$0xff] %v441
        %474 = vst [vmem:[#allocation2 + $0x58] sm:$0xff] %v442
        %475 = vst [vmem:[#allocation2 + $0x60] sm:$0xff] %v443
        %476 = vst [vmem:[#allocation2 + $0x68] sm:$0xff] %v444
        %477 = vst [vmem:[#allocation2 + $0x70] sm:$0xff] %v445
        %478 = vst [vmem:[#allocation2 + $0x78] sm:$0xff] %v446
      $region40: #{run.1} parent=35 // pred_fallthru
        _
      %p479 = scmp.eq.s32.totalorder %s20, 1
      %p480 = scmp.eq.s32.totalorder %s20, 2
      %p481 = por %p479, %p480
      // Predicated region
      $region41: #{run.1} parent=35 // pred_check
        %p482 = pneg %p481
      $region42: #{run.1} parent=35 // pred_check_branch
        %484 = sbr.rel (%p482) target = $region44
      $region43: #{run.1} parent=35 // pred_region
        %v485 = vld [vmem:[%s265] sm:$0xf]
        %v486 = vld [vmem:[%s265 + $0x4] sm:$0xf]
        %v487 = vld [vmem:[%s265 + $0x8] sm:$0xf]
        %v488 = vld [vmem:[%s265 + $0xc] sm:$0xf]
        %v489 = vld [vmem:[%s265 + $0x10] sm:$0xf]
        %v490 = vld [vmem:[%s265 + $0x14] sm:$0xf]
        %v491 = vld [vmem:[%s265 + $0x18] sm:$0xf]
        %v492 = vld [vmem:[%s265 + $0x1c] sm:$0xf]
        %v493 = vld [vmem:[%s265 + $0x20] sm:$0xf]
        %v494 = vld [vmem:[%s265 + $0x24] sm:$0xf]
        %v495 = vld [vmem:[%s265 + $0x28] sm:$0xf]
        %v496 = vld [vmem:[%s265 + $0x2c] sm:$0xf]
        %v497 = vld [vmem:[%s265 + $0x30] sm:$0xf]
        %v498 = vld [vmem:[%s265 + $0x34] sm:$0xf]
        %v499 = vld [vmem:[%s265 + $0x38] sm:$0xf]
        %v500 = vld [vmem:[%s265 + $0x3c] sm:$0xf]
        %v501 = vld [vmem:[%s265 + $0x40] sm:$0xf]
        %v502 = vld [vmem:[%s265 + $0x44] sm:$0xf]
        %v503 = vld [vmem:[%s265 + $0x48] sm:$0xf]
        %v504 = vld [vmem:[%s265 + $0x4c] sm:$0xf]
        %v505 = vld [vmem:[%s265 + $0x50] sm:$0xf]
        %v506 = vld [vmem:[%s265 + $0x54] sm:$0xf]
        %v507 = vld [vmem:[%s265 + $0x58] sm:$0xf]
        %v508 = vld [vmem:[%s265 + $0x5c] sm:$0xf]
        %v509 = vld [vmem:[%s265 + $0x60] sm:$0xf]
        %v510 = vld [vmem:[%s265 + $0x64] sm:$0xf]
        %v511 = vld [vmem:[%s265 + $0x68] sm:$0xf]
        %v512 = vld [vmem:[%s265 + $0x6c] sm:$0xf]
        %v513 = vld [vmem:[%s265 + $0x70] sm:$0xf]
        %v514 = vld [vmem:[%s265 + $0x74] sm:$0xf]
        %v515 = vld [vmem:[%s265 + $0x78] sm:$0xf]
        %v516 = vld [vmem:[%s265 + $0x7c] sm:$0xf]
        %v549 = vunpack.c.l.b16 %v485
        %v550 = vunpack.c.l.b16 %v486
        %v551 = vunpack.c.l.b16 %v487
        %v552 = vunpack.c.l.b16 %v488
        %v553 = vunpack.c.l.b16 %v489
        %v554 = vunpack.c.l.b16 %v490
        %v555 = vunpack.c.l.b16 %v491
        %v556 = vunpack.c.l.b16 %v492
        %v557 = vunpack.c.l.b16 %v493
        %v558 = vunpack.c.l.b16 %v494
        %v559 = vunpack.c.l.b16 %v495
        %v560 = vunpack.c.l.b16 %v496
        %v561 = vunpack.c.l.b16 %v497
        %v562 = vunpack.c.l.b16 %v498
        %v563 = vunpack.c.l.b16 %v499
        %v564 = vunpack.c.l.b16 %v500
        %v565 = vunpack.c.l.b16 %v501
        %v566 = vunpack.c.l.b16 %v502
        %v567 = vunpack.c.l.b16 %v503
        %v568 = vunpack.c.l.b16 %v504
        %v569 = vunpack.c.l.b16 %v505
        %v570 = vunpack.c.l.b16 %v506
        %v571 = vunpack.c.l.b16 %v507
        %v572 = vunpack.c.l.b16 %v508
        %v573 = vunpack.c.l.b16 %v509
        %v574 = vunpack.c.l.b16 %v510
        %v575 = vunpack.c.l.b16 %v511
        %v576 = vunpack.c.l.b16 %v512
        %v577 = vunpack.c.l.b16 %v513
        %v578 = vunpack.c.l.b16 %v514
        %v579 = vunpack.c.l.b16 %v515
        %v580 = vunpack.c.l.b16 %v516
        %v581 = vpack.c.b16 %v550, %v549
        %v582 = vpack.c.b16 %v552, %v551
        %v583 = vpack.c.b16 %v554, %v553
        %v584 = vpack.c.b16 %v556, %v555
        %v585 = vpack.c.b16 %v558, %v557
        %v586 = vpack.c.b16 %v560, %v559
        %v587 = vpack.c.b16 %v562, %v561
        %v588 = vpack.c.b16 %v564, %v563
        %v589 = vpack.c.b16 %v566, %v565
        %v590 = vpack.c.b16 %v568, %v567
        %v591 = vpack.c.b16 %v570, %v569
        %v592 = vpack.c.b16 %v572, %v571
        %v593 = vpack.c.b16 %v574, %v573
        %v594 = vpack.c.b16 %v576, %v575
        %v595 = vpack.c.b16 %v578, %v577
        %v596 = vpack.c.b16 %v580, %v579
        %613 = vst [vmem:[#allocation2] sm:$0xff] %v581
        %614 = vst [vmem:[#allocation2 + $0x8] sm:$0xff] %v582
        %615 = vst [vmem:[#allocation2 + $0x10] sm:$0xff] %v583
        %616 = vst [vmem:[#allocation2 + $0x18] sm:$0xff] %v584
        %617 = vst [vmem:[#allocation2 + $0x20] sm:$0xff] %v585
        %618 = vst [vmem:[#allocation2 + $0x28] sm:$0xff] %v586
        %619 = vst [vmem:[#allocation2 + $0x30] sm:$0xff] %v587
        %620 = vst [vmem:[#allocation2 + $0x38] sm:$0xff] %v588
        %621 = vst [vmem:[#allocation2 + $0x40] sm:$0xff] %v589
        %622 = vst [vmem:[#allocation2 + $0x48] sm:$0xff] %v590
        %623 = vst [vmem:[#allocation2 + $0x50] sm:$0xff] %v591
        %624 = vst [vmem:[#allocation2 + $0x58] sm:$0xff] %v592
        %625 = vst [vmem:[#allocation2 + $0x60] sm:$0xff] %v593
        %626 = vst [vmem:[#allocation2 + $0x68] sm:$0xff] %v594
        %627 = vst [vmem:[#allocation2 + $0x70] sm:$0xff] %v595
        %628 = vst [vmem:[#allocation2 + $0x78] sm:$0xff] %v596
      $region44: #{run.1} parent=35 // pred_fallthru
        _
      %v629 = vld [vmem:[%s249] sm:$0xf]
      %v630 = vld [vmem:[%s249 + $0x4] sm:$0xf]
      %v631 = vld [vmem:[%s249 + $0x8] sm:$0xf]
      %v632 = vld [vmem:[%s249 + $0xc] sm:$0xf]
      %v633 = vld [vmem:[%s249 + $0x10] sm:$0xf]
      %v634 = vld [vmem:[%s249 + $0x14] sm:$0xf]
      %v635 = vld [vmem:[%s249 + $0x18] sm:$0xf]
      %v636 = vld [vmem:[%s255] sm:$0xf]
      %v637 = vld [vmem:[%s255 + $0x4] sm:$0xf]
      %v638 = vld [vmem:[%s255 + $0x8] sm:$0xf]
      %v639 = vld [vmem:[%s255 + $0xc] sm:$0xf]
      %v640 = vld [vmem:[%s255 + $0x10] sm:$0xf]
      %v641 = vld [vmem:[%s255 + $0x14] sm:$0xf]
      %v642 = vld [vmem:[%s255 + $0x18] sm:$0xf]
      %v643 = vld [vmem:[%s255 + $0x1c] sm:$0xf]
      %v644 = vld [vmem:[%s255 + $0x20] sm:$0xf]
      %v645 = vld [vmem:[%s255 + $0x24] sm:$0xf]
      %v646 = vld [vmem:[%s255 + $0x28] sm:$0xf]
      %v647 = vld [vmem:[%s255 + $0x2c] sm:$0xf]
      %v648 = vld [vmem:[%s255 + $0x30] sm:$0xf]
      %v649 = vld [vmem:[%s255 + $0x34] sm:$0xf]
      %v650 = vld [vmem:[%s255 + $0x38] sm:$0xf]
      %v651 = vld [vmem:[%s255 + $0x3c] sm:$0xf]
      %v652 = vld [vmem:[%s255 + $0x40] sm:$0xf]
      %v653 = vld [vmem:[%s255 + $0x44] sm:$0xf]
      %v654 = vld [vmem:[%s255 + $0x48] sm:$0xf]
      %v655 = vld [vmem:[%s255 + $0x4c] sm:$0xf]
      %v656 = vld [vmem:[%s255 + $0x50] sm:$0xf]
      %v657 = vld [vmem:[%s255 + $0x54] sm:$0xf]
      %v658 = vld [vmem:[%s255 + $0x58] sm:$0xf]
      %v659 = vld [vmem:[%s255 + $0x5c] sm:$0xf]
      %v660 = vld [vmem:[%s255 + $0x60] sm:$0xf]
      %v661 = vld [vmem:[%s255 + $0x64] sm:$0xf]
      %v662 = vld [vmem:[%s255 + $0x68] sm:$0xf]
      %v663 = vld [vmem:[%s255 + $0x6c] sm:$0xf]
      %v664 = vld [vmem:[%s255 + $0x70] sm:$0xf]
      %v665 = vld [vmem:[%s255 + $0x74] sm:$0xf]
      %v666 = vld [vmem:[%s255 + $0x78] sm:$0xf]
      %v667 = vld [vmem:[%s255 + $0x7c] sm:$0xf]
      %v675 = vunpack.c.l.b16 %v629
      %v676 = vunpack.c.l.b16 %v630
      %v677 = vunpack.c.l.b16 %v631
      %v678 = vunpack.c.l.b16 %v632
      %v679 = vunpack.c.l.b16 %v633
      %v680 = vunpack.c.l.b16 %v634
      %v681 = vunpack.c.l.b16 %v635
      %v682 = vpack.c.b16 %v676, %v675
      %v683 = vpack.c.b16 %v678, %v677
      %v684 = vpack.c.b16 %v680, %v679
      %v685 = vpack.c.b16 %v681, %v681
      %v722 = vunpack.c.l.b16 %v636
      %v723 = vunpack.c.l.b16 %v637
      %v724 = vunpack.c.l.b16 %v638
      %v725 = vunpack.c.l.b16 %v639
      %v726 = vunpack.c.l.b16 %v640
      %v727 = vunpack.c.l.b16 %v641
      %v728 = vunpack.c.l.b16 %v642
      %v729 = vunpack.c.l.b16 %v643
      %v730 = vunpack.c.l.b16 %v644
      %v731 = vunpack.c.l.b16 %v645
      %v732 = vunpack.c.l.b16 %v646
      %v733 = vunpack.c.l.b16 %v647
      %v734 = vunpack.c.l.b16 %v648
      %v735 = vunpack.c.l.b16 %v649
      %v736 = vunpack.c.l.b16 %v650
      %v737 = vunpack.c.l.b16 %v651
      %v738 = vunpack.c.l.b16 %v652
      %v739 = vunpack.c.l.b16 %v653
      %v740 = vunpack.c.l.b16 %v654
      %v741 = vunpack.c.l.b16 %v655
      %v742 = vunpack.c.l.b16 %v656
      %v743 = vunpack.c.l.b16 %v657
      %v744 = vunpack.c.l.b16 %v658
      %v745 = vunpack.c.l.b16 %v659
      %v746 = vunpack.c.l.b16 %v660
      %v747 = vunpack.c.l.b16 %v661
      %v748 = vunpack.c.l.b16 %v662
      %v749 = vunpack.c.l.b16 %v663
      %v750 = vunpack.c.l.b16 %v664
      %v751 = vunpack.c.l.b16 %v665
      %v752 = vunpack.c.l.b16 %v666
      %v753 = vunpack.c.l.b16 %v667
      %v754 = vpack.c.b16 %v723, %v722
      %v755 = vpack.c.b16 %v725, %v724
      %v756 = vpack.c.b16 %v727, %v726
      %v757 = vpack.c.b16 %v729, %v728
      %v758 = vpack.c.b16 %v731, %v730
      %v759 = vpack.c.b16 %v733, %v732
      %v760 = vpack.c.b16 %v735, %v734
      %v761 = vpack.c.b16 %v737, %v736
      %v762 = vpack.c.b16 %v739, %v738
      %v763 = vpack.c.b16 %v741, %v740
      %v764 = vpack.c.b16 %v743, %v742
      %v765 = vpack.c.b16 %v745, %v744
      %v766 = vpack.c.b16 %v747, %v746
      %v767 = vpack.c.b16 %v749, %v748
      %v768 = vpack.c.b16 %v751, %v750
      %v769 = vpack.c.b16 %v753, %v752
      %786 = vmatprep.subr.bf16.mxu0 0
      %787 = vmatpush1.bf16.xpose.msra.mxu0 %v754
      %788 = vmatprep.subr.bf16.mxu0 0
      %789 = vmatpush1.bf16.xpose.msra.mxu0 %v755
      %790 = vmatprep.subr.bf16.mxu0 0
      %791 = vmatpush1.bf16.xpose.msra.mxu0 %v756
      %792 = vmatprep.subr.bf16.mxu0 0
      %793 = vmatpush1.bf16.xpose.msra.mxu0 %v757
      %794 = vmatprep.subr.bf16.mxu0 0
      %795 = vmatpush1.bf16.xpose.msra.mxu0 %v758
      %796 = vmatprep.subr.bf16.mxu0 0
      %797 = vmatpush1.bf16.xpose.msra.mxu0 %v759
      %798 = vmatprep.subr.bf16.mxu0 0
      %799 = vmatpush1.bf16.xpose.msra.mxu0 %v760
      %800 = vmatprep.subr.bf16.mxu0 0
      %801 = vmatpush1.bf16.xpose.msra.mxu0 %v761
      %802 = vmatprep.subr.bf16.mxu0 0
      %803 = vmatpush1.bf16.xpose.msra.mxu0 %v762
      %804 = vmatprep.subr.bf16.mxu0 0
      %805 = vmatpush1.bf16.xpose.msra.mxu0 %v763
      %806 = vmatprep.subr.bf16.mxu0 0
      %807 = vmatpush1.bf16.xpose.msra.mxu0 %v764
      %808 = vmatprep.subr.bf16.mxu0 0
      %809 = vmatpush1.bf16.xpose.msra.mxu0 %v765
      %810 = vmatprep.subr.bf16.mxu0 0
      %811 = vmatpush1.bf16.xpose.msra.mxu0 %v766
      %812 = vmatprep.subr.bf16.mxu0 0
      %813 = vmatpush1.bf16.xpose.msra.mxu0 %v767
      %814 = vmatprep.subr.bf16.mxu0 0
      %815 = vmatpush1.bf16.xpose.msra.mxu0 %v768
      %816 = vmatprep.subr.bf16.mxu0 0
      %817 = vmatpush1.bf16.xpose.msra.mxu0 %v769
      %818 = vmatprep.mubr.bf16.mxu0 0
      %819 = vmatmul.mubr.bf16.gmra.mrb[0].mxu0 %v682
      %v820 = vpop.f32.mrb[0].mxu0
      %v821 = vadd.f32 0.0, %v820
      %v822 = vpop.f32.mrb[0].mxu0
      %v823 = vadd.f32 0.0, %v822
      %v824 = vpop.f32.mrb[0].mxu0
      %v825 = vadd.f32 0.0, %v824
      %v826 = vpop.f32.mrb[0].mxu0
      %v827 = vadd.f32 0.0, %v826
      %828 = vmatprep.mubr.bf16.mxu0 0
      %829 = vmatmul.mubr.bf16.gmra.mrb[0].mxu0 %v683
      %v830 = vpop.f32.mrb[0].mxu0
      %v831 = vadd.f32 0.0, %v830
      %v832 = vpop.f32.mrb[0].mxu0
      %v833 = vadd.f32 0.0, %v832
      %v834 = vpop.f32.mrb[0].mxu0
      %v835 = vadd.f32 0.0, %v834
      %v836 = vpop.f32.mrb[0].mxu0
      %v837 = vadd.f32 0.0, %v836
      %838 = vmatprep.mubr.bf16.mxu0 0
      %839 = vmatmul.mubr.bf16.gmra.mrb[0].mxu0 %v684
      %v840 = vpop.f32.mrb[0].mxu0
      %v841 = vadd.f32 0.0, %v840
      %v842 = vpop.f32.mrb[0].mxu0
      %v843 = vadd.f32 0.0, %v842
      %v844 = vpop.f32.mrb[0].mxu0
      %v845 = vadd.f32 0.0, %v844
      %v846 = vpop.f32.mrb[0].mxu0
      %v847 = vadd.f32 0.0, %v846
      %848 = vmatprep.mubr.bf16.mxu0 0
      %849 = vmatmul.mubr.bf16.gmra.mrb[0].mxu0 %v685
      %v850 = vpop.f32.mrb[0].mxu0
      %v851 = vadd.f32 0.0, %v850
      %v852 = vpop.f32.mrb[0].mxu0
      %v853 = vadd.f32 0.0, %v852
      %v854 = vpop.f32.mrb[0].mxu0
      %v855 = vpop.f32.mrb[0].mxu0
      %856 = vdwg.mxu0
      %v857 = vmax.f32 %v821, %v823
      %858 = vmax.xlane.f32.xlu0 %v857
      %v859 = vpop.xlane.xlu0 %858
      %v860 = vmax.f32 %v825, %v827
      %861 = vmax.xlane.f32.xlu0 %v860
      %v862 = vpop.xlane.xlu0 %861
      %v863 = vmax.f32 %v831, %v833
      %864 = vmax.xlane.f32.xlu0 %v863
      %v865 = vpop.xlane.xlu0 %864
      %v866 = vmax.f32 %v835, %v837
      %867 = vmax.xlane.f32.xlu0 %v866
      %v868 = vpop.xlane.xlu0 %867
      %v869 = vmax.f32 %v841, %v843
      %870 = vmax.xlane.f32.xlu0 %v869
      %v871 = vpop.xlane.xlu0 %870
      %v872 = vmax.f32 %v845, %v847
      %873 = vmax.xlane.f32.xlu0 %v872
      %v874 = vpop.xlane.xlu0 %873
      %v875 = vmax.f32 %v851, %v853
      %876 = vmax.xlane.f32.xlu0 %v875
      %v877 = vpop.xlane.xlu0 %876
      %v878 = vsub.f32 %v821, %v859
      %v879 = vsub.f32 %v823, %v859
      %v880 = vsub.f32 %v825, %v862
      %v881 = vsub.f32 %v827, %v862
      %v882 = vsub.f32 %v831, %v865
      %v883 = vsub.f32 %v833, %v865
      %v884 = vsub.f32 %v835, %v868
      %v885 = vsub.f32 %v837, %v868
      %v886 = vsub.f32 %v841, %v871
      %v887 = vsub.f32 %v843, %v871
      %v888 = vsub.f32 %v845, %v874
      %v889 = vsub.f32 %v847, %v874
      %v890 = vsub.f32 %v851, %v877
      %v891 = vsub.f32 %v853, %v877
      %v892 = vmul.f32 %v878, 1.442695
      %v893 = vpow.pop %v892
      %v894 = vmul.f32 %v879, 1.442695
      %v895 = vpow.pop %v894
      %v896 = vmul.f32 %v880, 1.442695
      %v897 = vpow.pop %v896
      %v898 = vmul.f32 %v881, 1.442695
      %v899 = vpow.pop %v898
      %v900 = vmul.f32 %v882, 1.442695
      %v901 = vpow.pop %v900
      %v902 = vmul.f32 %v883, 1.442695
      %v903 = vpow.pop %v902
      %v904 = vmul.f32 %v884, 1.442695
      %v905 = vpow.pop %v904
      %v906 = vmul.f32 %v885, 1.442695
      %v907 = vpow.pop %v906
      %v908 = vmul.f32 %v886, 1.442695
      %v909 = vpow.pop %v908
      %v910 = vmul.f32 %v887, 1.442695
      %v911 = vpow.pop %v910
      %v912 = vmul.f32 %v888, 1.442695
      %v913 = vpow.pop %v912
      %v914 = vmul.f32 %v889, 1.442695
      %v915 = vpow.pop %v914
      %v916 = vmul.f32 %v890, 1.442695
      %v917 = vpow.pop %v916
      %v918 = vmul.f32 %v891, 1.442695
      %v919 = vpow.pop %v918
      %s920 = smul.u32 %s20, 56
      %s921 = sshra.s32 %s920, 3
      %s922 = sand.u32 %s920, 7
      %s923 = smul.u32 %s921, 2
      %s924 = smul.addr %s923, 4
      %s925 = scalar_lea.vmem %s0, %s924
      %v926 = vld [vmem:[%s925] sm:$0xff]
      %v927 = vld [vmem:[%s925 + $0x8] sm:$0xff]
      %v928 = vld [vmem:[%s925 + $0x10] sm:$0xff]
      %v929 = vld [vmem:[%s925 + $0x18] sm:$0xff]
      %v930 = vld [vmem:[%s925 + $0x20] sm:$0xff]
      %v931 = vld [vmem:[%s925 + $0x28] sm:$0xff]
      %v932 = vld [vmem:[%s925 + $0x30] sm:$0xff]
      %v933 = vunpack.c.l.bf16 %v926
      %v934 = vunpack.c.h.bf16 %v926
      %v935 = vunpack.c.l.bf16 %v927
      %v936 = vunpack.c.h.bf16 %v927
      %v937 = vunpack.c.l.bf16 %v928
      %v938 = vunpack.c.h.bf16 %v928
      %v939 = vunpack.c.l.bf16 %v929
      %v940 = vunpack.c.h.bf16 %v929
      %v941 = vunpack.c.l.bf16 %v930
      %v942 = vunpack.c.h.bf16 %v930
      %v943 = vunpack.c.l.bf16 %v931
      %v944 = vunpack.c.h.bf16 %v931
      %v945 = vunpack.c.l.bf16 %v932
      %v946 = vunpack.c.h.bf16 %v932
      %v947 = vmul.f32 %v933, %v893
      %v948 = vmul.f32 %v934, %v895
      %v949 = vmul.f32 %v935, %v897
      %v950 = vmul.f32 %v936, %v899
      %v951 = vmul.f32 %v937, %v901
      %v952 = vmul.f32 %v938, %v903
      %v953 = vmul.f32 %v939, %v905
      %v954 = vmul.f32 %v940, %v907
      %v955 = vmul.f32 %v941, %v909
      %v956 = vmul.f32 %v942, %v911
      %v957 = vmul.f32 %v943, %v913
      %v958 = vmul.f32 %v944, %v915
      %v959 = vmul.f32 %v945, %v917
      %v960 = vmul.f32 %v946, %v919
      %v961 = vadd.f32 %v947, %v948
      %962 = vadd.xlane.f32.xlu0 %v961
      %v963 = vpop.xlane.xlu0 %962
      %v964 = vadd.f32 %v949, %v950
      %965 = vadd.xlane.f32.xlu0 %v964
      %v966 = vpop.xlane.xlu0 %965
      %v967 = vadd.f32 %v951, %v952
      %968 = vadd.xlane.f32.xlu0 %v967
      %v969 = vpop.xlane.xlu0 %968
      %v970 = vadd.f32 %v953, %v954
      %971 = vadd.xlane.f32.xlu0 %v970
      %v972 = vpop.xlane.xlu0 %971
      %v973 = vadd.f32 %v955, %v956
      %974 = vadd.xlane.f32.xlu0 %v973
      %v975 = vpop.xlane.xlu0 %974
      %v976 = vadd.f32 %v957, %v958
      %977 = vadd.xlane.f32.xlu0 %v976
      %v978 = vpop.xlane.xlu0 %977
      %v979 = vadd.f32 %v959, %v960
      %980 = vadd.xlane.f32.xlu0 %v979
      %v981 = vpop.xlane.xlu0 %980
      %v982 = vmax.f32 %v963, 1e-30
      %v983 = vmax.f32 %v966, 1e-30
      %v984 = vmax.f32 %v969, 1e-30
      %v985 = vmax.f32 %v972, 1e-30
      %v986 = vmax.f32 %v975, 1e-30
      %v987 = vmax.f32 %v978, 1e-30
      %v988 = vmax.f32 %v981, 1e-30
      %v989 = vrcp.pop %v982
      %v990 = vrcp.pop %v983
      %v991 = vrcp.pop %v984
      %v992 = vrcp.pop %v985
      %v993 = vrcp.pop %v986
      %v994 = vrcp.pop %v987
      %v995 = vrcp.pop %v988
      %v996 = vmul.f32 %v989, 0.33333334
      %v997 = vmul.f32 %v990, 0.33333334
      %v998 = vmul.f32 %v991, 0.33333334
      %v999 = vmul.f32 %v992, 0.33333334
      %v1000 = vmul.f32 %v993, 0.33333334
      %v1001 = vmul.f32 %v994, 0.33333334
      %v1002 = vmul.f32 %v995, 0.33333334
      %v1003 = vmul.f32 %v947, %v996
      %v1004 = vmul.f32 %v948, %v996
      %v1005 = vmul.f32 %v949, %v997
      %v1006 = vmul.f32 %v950, %v997
      %v1007 = vmul.f32 %v951, %v998
      %v1008 = vmul.f32 %v952, %v998
      %v1009 = vmul.f32 %v953, %v999
      %v1010 = vmul.f32 %v954, %v999
      %v1011 = vmul.f32 %v955, %v1000
      %v1012 = vmul.f32 %v956, %v1000
      %v1013 = vmul.f32 %v957, %v1001
      %v1014 = vmul.f32 %v958, %v1001
      %v1015 = vmul.f32 %v959, %v1002
      %v1016 = vmul.f32 %v960, %v1002
      %s1017 = sadd.s32 %s923, 42
      %s1018 = smul.addr %s1017, 4
      %s1019 = scalar_lea.vmem %s0, %s1018
      %v1020 = vld [vmem:[%s1019] sm:$0xff]
      %v1021 = vld [vmem:[%s1019 + $0x8] sm:$0xff]
      %v1022 = vld [vmem:[%s1019 + $0x10] sm:$0xff]
      %v1023 = vld [vmem:[%s1019 + $0x18] sm:$0xff]
      %v1024 = vld [vmem:[%s1019 + $0x20] sm:$0xff]
      %v1025 = vld [vmem:[%s1019 + $0x28] sm:$0xff]
      %v1026 = vld [vmem:[%s1019 + $0x30] sm:$0xff]
      %v1027 = vunpack.c.l.bf16 %v1020
      %v1028 = vunpack.c.h.bf16 %v1020
      %v1029 = vunpack.c.l.bf16 %v1021
      %v1030 = vunpack.c.h.bf16 %v1021
      %v1031 = vunpack.c.l.bf16 %v1022
      %v1032 = vunpack.c.h.bf16 %v1022
      %v1033 = vunpack.c.l.bf16 %v1023
      %v1034 = vunpack.c.h.bf16 %v1023
      %v1035 = vunpack.c.l.bf16 %v1024
      %v1036 = vunpack.c.h.bf16 %v1024
      %v1037 = vunpack.c.l.bf16 %v1025
      %v1038 = vunpack.c.h.bf16 %v1025
      %v1039 = vunpack.c.l.bf16 %v1026
      %v1040 = vunpack.c.h.bf16 %v1026
      %v1041 = vmul.f32 %v1027, %v893
      %v1042 = vmul.f32 %v1028, %v895
      %v1043 = vmul.f32 %v1029, %v897
      %v1044 = vmul.f32 %v1030, %v899
      %v1045 = vmul.f32 %v1031, %v901
      %v1046 = vmul.f32 %v1032, %v903
      %v1047 = vmul.f32 %v1033, %v905
      %v1048 = vmul.f32 %v1034, %v907
      %v1049 = vmul.f32 %v1035, %v909
      %v1050 = vmul.f32 %v1036, %v911
      %v1051 = vmul.f32 %v1037, %v913
      %v1052 = vmul.f32 %v1038, %v915
      %v1053 = vmul.f32 %v1039, %v917
      %v1054 = vmul.f32 %v1040, %v919
      %v1055 = vadd.f32 %v1041, %v1042
      %1056 = vadd.xlane.f32.xlu0 %v1055
      %v1057 = vpop.xlane.xlu0 %1056
      %v1058 = vadd.f32 %v1043, %v1044
      %1059 = vadd.xlane.f32.xlu0 %v1058
      %v1060 = vpop.xlane.xlu0 %1059
      %v1061 = vadd.f32 %v1045, %v1046
      %1062 = vadd.xlane.f32.xlu0 %v1061
      %v1063 = vpop.xlane.xlu0 %1062
      %v1064 = vadd.f32 %v1047, %v1048
      %1065 = vadd.xlane.f32.xlu0 %v1064
      %v1066 = vpop.xlane.xlu0 %1065
      %v1067 = vadd.f32 %v1049, %v1050
      %1068 = vadd.xlane.f32.xlu0 %v1067
      %v1069 = vpop.xlane.xlu0 %1068
      %v1070 = vadd.f32 %v1051, %v1052
      %1071 = vadd.xlane.f32.xlu0 %v1070
      %v1072 = vpop.xlane.xlu0 %1071
      %v1073 = vadd.f32 %v1053, %v1054
      %1074 = vadd.xlane.f32.xlu0 %v1073
      %v1075 = vpop.xlane.xlu0 %1074
      %v1076 = vmax.f32 %v1057, 1e-30
      %v1077 = vmax.f32 %v1060, 1e-30
      %v1078 = vmax.f32 %v1063, 1e-30
      %v1079 = vmax.f32 %v1066, 1e-30
      %v1080 = vmax.f32 %v1069, 1e-30
      %v1081 = vmax.f32 %v1072, 1e-30
      %v1082 = vmax.f32 %v1075, 1e-30
      %v1083 = vrcp.pop %v1076
      %v1084 = vrcp.pop %v1077
      %v1085 = vrcp.pop %v1078
      %v1086 = vrcp.pop %v1079
      %v1087 = vrcp.pop %v1080
      %v1088 = vrcp.pop %v1081
      %v1089 = vrcp.pop %v1082
      %v1090 = vmul.f32 %v1083, 0.33333334
      %v1091 = vmul.f32 %v1084, 0.33333334
      %v1092 = vmul.f32 %v1085, 0.33333334
      %v1093 = vmul.f32 %v1086, 0.33333334
      %v1094 = vmul.f32 %v1087, 0.33333334
      %v1095 = vmul.f32 %v1088, 0.33333334
      %v1096 = vmul.f32 %v1089, 0.33333334
      %v1097 = vmul.f32 %v1041, %v1090
      %v1098 = vmul.f32 %v1042, %v1090
      %v1099 = vmul.f32 %v1043, %v1091
      %v1100 = vmul.f32 %v1044, %v1091
      %v1101 = vmul.f32 %v1045, %v1092
      %v1102 = vmul.f32 %v1046, %v1092
      %v1103 = vmul.f32 %v1047, %v1093
      %v1104 = vmul.f32 %v1048, %v1093
      %v1105 = vmul.f32 %v1049, %v1094
      %v1106 = vmul.f32 %v1050, %v1094
      %v1107 = vmul.f32 %v1051, %v1095
      %v1108 = vmul.f32 %v1052, %v1095
      %v1109 = vmul.f32 %v1053, %v1096
      %v1110 = vmul.f32 %v1054, %v1096
      %v1111 = vadd.f32 %v1003, %v1097
      %v1112 = vadd.f32 %v1004, %v1098
      %v1113 = vadd.f32 %v1005, %v1099
      %v1114 = vadd.f32 %v1006, %v1100
      %v1115 = vadd.f32 %v1007, %v1101
      %v1116 = vadd.f32 %v1008, %v1102
      %v1117 = vadd.f32 %v1009, %v1103
      %v1118 = vadd.f32 %v1010, %v1104
      %v1119 = vadd.f32 %v1011, %v1105
      %v1120 = vadd.f32 %v1012, %v1106
      %v1121 = vadd.f32 %v1013, %v1107
      %v1122 = vadd.f32 %v1014, %v1108
      %v1123 = vadd.f32 %v1015, %v1109
      %v1124 = vadd.f32 %v1016, %v1110
      %s1125 = sadd.s32 %s923, 84
      %s1126 = smul.addr %s1125, 4
      %s1127 = scalar_lea.vmem %s0, %s1126
      %v1128 = vld [vmem:[%s1127] sm:$0xff]
      %v1129 = vld [vmem:[%s1127 + $0x8] sm:$0xff]
      %v1130 = vld [vmem:[%s1127 + $0x10] sm:$0xff]
      %v1131 = vld [vmem:[%s1127 + $0x18] sm:$0xff]
      %v1132 = vld [vmem:[%s1127 + $0x20] sm:$0xff]
      %v1133 = vld [vmem:[%s1127 + $0x28] sm:$0xff]
      %v1134 = vld [vmem:[%s1127 + $0x30] sm:$0xff]
      %v1135 = vunpack.c.l.bf16 %v1128
      %v1136 = vunpack.c.h.bf16 %v1128
      %v1137 = vunpack.c.l.bf16 %v1129
      %v1138 = vunpack.c.h.bf16 %v1129
      %v1139 = vunpack.c.l.bf16 %v1130
      %v1140 = vunpack.c.h.bf16 %v1130
      %v1141 = vunpack.c.l.bf16 %v1131
      %v1142 = vunpack.c.h.bf16 %v1131
      %v1143 = vunpack.c.l.bf16 %v1132
      %v1144 = vunpack.c.h.bf16 %v1132
      %v1145 = vunpack.c.l.bf16 %v1133
      %v1146 = vunpack.c.h.bf16 %v1133
      %v1147 = vunpack.c.l.bf16 %v1134
      %v1148 = vunpack.c.h.bf16 %v1134
      %v1149 = vmul.f32 %v1135, %v893
      %v1150 = vmul.f32 %v1136, %v895
      %v1151 = vmul.f32 %v1137, %v897
      %v1152 = vmul.f32 %v1138, %v899
      %v1153 = vmul.f32 %v1139, %v901
      %v1154 = vmul.f32 %v1140, %v903
      %v1155 = vmul.f32 %v1141, %v905
      %v1156 = vmul.f32 %v1142, %v907
      %v1157 = vmul.f32 %v1143, %v909
      %v1158 = vmul.f32 %v1144, %v911
      %v1159 = vmul.f32 %v1145, %v913
      %v1160 = vmul.f32 %v1146, %v915
      %v1161 = vmul.f32 %v1147, %v917
      %v1162 = vmul.f32 %v1148, %v919
      %v1163 = vadd.f32 %v1149, %v1150
      %1164 = vadd.xlane.f32.xlu0 %v1163
      %v1165 = vpop.xlane.xlu0 %1164
      %v1166 = vadd.f32 %v1151, %v1152
      %1167 = vadd.xlane.f32.xlu0 %v1166
      %v1168 = vpop.xlane.xlu0 %1167
      %v1169 = vadd.f32 %v1153, %v1154
      %1170 = vadd.xlane.f32.xlu0 %v1169
      %v1171 = vpop.xlane.xlu0 %1170
      %v1172 = vadd.f32 %v1155, %v1156
      %1173 = vadd.xlane.f32.xlu0 %v1172
      %v1174 = vpop.xlane.xlu0 %1173
      %v1175 = vadd.f32 %v1157, %v1158
      %1176 = vadd.xlane.f32.xlu0 %v1175
      %v1177 = vpop.xlane.xlu0 %1176
      %v1178 = vadd.f32 %v1159, %v1160
      %1179 = vadd.xlane.f32.xlu0 %v1178
      %v1180 = vpop.xlane.xlu0 %1179
      %v1181 = vadd.f32 %v1161, %v1162
      %1182 = vadd.xlane.f32.xlu0 %v1181
      %v1183 = vpop.xlane.xlu0 %1182
      %v1184 = vmax.f32 %v1165, 1e-30
      %v1185 = vmax.f32 %v1168, 1e-30
      %v1186 = vmax.f32 %v1171, 1e-30
      %v1187 = vmax.f32 %v1174, 1e-30
      %v1188 = vmax.f32 %v1177, 1e-30
      %v1189 = vmax.f32 %v1180, 1e-30
      %v1190 = vmax.f32 %v1183, 1e-30
      %v1191 = vrcp.pop %v1184
      %v1192 = vrcp.pop %v1185
      %v1193 = vrcp.pop %v1186
      %v1194 = vrcp.pop %v1187
      %v1195 = vrcp.pop %v1188
      %v1196 = vrcp.pop %v1189
      %v1197 = vrcp.pop %v1190
      %v1198 = vmul.f32 %v1191, 0.33333334
      %v1199 = vmul.f32 %v1192, 0.33333334
      %v1200 = vmul.f32 %v1193, 0.33333334
      %v1201 = vmul.f32 %v1194, 0.33333334
      %v1202 = vmul.f32 %v1195, 0.33333334
      %v1203 = vmul.f32 %v1196, 0.33333334
      %v1204 = vmul.f32 %v1197, 0.33333334
      %v1205 = vmul.f32 %v1149, %v1198
      %v1206 = vmul.f32 %v1150, %v1198
      %v1207 = vmul.f32 %v1151, %v1199
      %v1208 = vmul.f32 %v1152, %v1199
      %v1209 = vmul.f32 %v1153, %v1200
      %v1210 = vmul.f32 %v1154, %v1200
      %v1211 = vmul.f32 %v1155, %v1201
      %v1212 = vmul.f32 %v1156, %v1201
      %v1213 = vmul.f32 %v1157, %v1202
      %v1214 = vmul.f32 %v1158, %v1202
      %v1215 = vmul.f32 %v1159, %v1203
      %v1216 = vmul.f32 %v1160, %v1203
      %v1217 = vmul.f32 %v1161, %v1204
      %v1218 = vmul.f32 %v1162, %v1204
      %v1219 = vadd.f32 %v1111, %v1205
      %v1220 = vadd.f32 %v1112, %v1206
      %v1221 = vadd.f32 %v1113, %v1207
      %v1222 = vadd.f32 %v1114, %v1208
      %v1223 = vadd.f32 %v1115, %v1209
      %v1224 = vadd.f32 %v1116, %v1210
      %v1225 = vadd.f32 %v1117, %v1211
      %v1226 = vadd.f32 %v1118, %v1212
      %v1227 = vadd.f32 %v1119, %v1213
      %v1228 = vadd.f32 %v1120, %v1214
      %v1229 = vadd.f32 %v1121, %v1215
      %v1230 = vadd.f32 %v1122, %v1216
      %v1231 = vadd.f32 %v1123, %v1217
      %v1232 = vadd.f32 %v1124, %v1218
      %v1233 = vpack.c.bf16 %v1221, %v1219
      %v1234 = vpack.c.bf16 %v1222, %v1220
      %v1235 = vpack.c.bf16 %v1225, %v1223
      %v1236 = vpack.c.bf16 %v1226, %v1224
      %v1237 = vpack.c.bf16 %v1229, %v1227
      %v1238 = vpack.c.bf16 %v1230, %v1228
      %v1239 = vpack.c.bf16 %v1231, %v1231
      %v1240 = vpack.c.bf16 %v1232, %v1232
      %v1241 = vld [vmem:[#allocation2] sm:$0xff]
      %v1242 = vld [vmem:[#allocation2 + $0x8] sm:$0xff]
      %v1243 = vld [vmem:[#allocation2 + $0x10] sm:$0xff]
      %v1244 = vld [vmem:[#allocation2 + $0x18] sm:$0xff]
      %v1245 = vld [vmem:[#allocation2 + $0x20] sm:$0xff]
      %v1246 = vld [vmem:[#allocation2 + $0x28] sm:$0xff]
      %v1247 = vld [vmem:[#allocation2 + $0x30] sm:$0xff]
      %v1248 = vld [vmem:[#allocation2 + $0x38] sm:$0xff]
      %v1249 = vld [vmem:[#allocation2 + $0x40] sm:$0xff]
      %v1250 = vld [vmem:[#allocation2 + $0x48] sm:$0xff]
      %v1251 = vld [vmem:[#allocation2 + $0x50] sm:$0xff]
      %v1252 = vld [vmem:[#allocation2 + $0x58] sm:$0xff]
      %v1253 = vld [vmem:[#allocation2 + $0x60] sm:$0xff]
      %v1254 = vld [vmem:[#allocation2 + $0x68] sm:$0xff]
      %v1255 = vld [vmem:[#allocation2 + $0x70] sm:$0xff]
      %v1256 = vld [vmem:[#allocation2 + $0x78] sm:$0xff]
      %1257 = vmatprep.subr.bf16.mxu0 0
      %1258 = vmatpush1.bf16.msra.mxu0 %v1241
      %1259 = vmatprep.subr.bf16.mxu0 0
      %1260 = vmatpush1.bf16.msra.mxu0 %v1242
      %1261 = vmatprep.subr.bf16.mxu0 0
      %1262 = vmatpush1.bf16.msra.mxu0 %v1243
      %1263 = vmatprep.subr.bf16.mxu0 0
      %1264 = vmatpush1.bf16.msra.mxu0 %v1244
      %1265 = vmatprep.subr.bf16.mxu0 0
      %1266 = vmatpush1.bf16.msra.mxu0 %v1245
      %1267 = vmatprep.subr.bf16.mxu0 0
      %1268 = vmatpush1.bf16.msra.mxu0 %v1246
      %1269 = vmatprep.subr.bf16.mxu0 0
      %1270 = vmatpush1.bf16.msra.mxu0 %v1247
      %1271 = vmatprep.subr.bf16.mxu0 0
      %1272 = vmatpush1.bf16.msra.mxu0 %v1248
      %1273 = vmatprep.subr.bf16.mxu0 0
      %1274 = vmatpush1.bf16.msra.mxu0 %v1249
      %1275 = vmatprep.subr.bf16.mxu0 0
      %1276 = vmatpush1.bf16.msra.mxu0 %v1250
      %1277 = vmatprep.subr.bf16.mxu0 0
      %1278 = vmatpush1.bf16.msra.mxu0 %v1251
      %1279 = vmatprep.subr.bf16.mxu0 0
      %1280 = vmatpush1.bf16.msra.mxu0 %v1252
      %1281 = vmatprep.subr.bf16.mxu0 0
      %1282 = vmatpush1.bf16.msra.mxu0 %v1253
      %1283 = vmatprep.subr.bf16.mxu0 0
      %1284 = vmatpush1.bf16.msra.mxu0 %v1254
      %1285 = vmatprep.subr.bf16.mxu0 0
      %1286 = vmatpush1.bf16.msra.mxu0 %v1255
      %1287 = vmatprep.subr.bf16.mxu0 0
      %1288 = vmatpush1.bf16.msra.mxu0 %v1256
      %1289 = vmatprep.mubr.bf16.mxu0 %v1234
      %1290 = vmatmul.mubr.bf16.gmra.mrb[0].mxu0 %v1233
      %v1291 = vpop.f32.mrb[0].mxu0
      %v1292 = vadd.f32 0.0, %v1291
      %v1293 = vpop.f32.mrb[0].mxu0
      %v1294 = vpop.f32.mrb[0].mxu0
      %v1295 = vadd.f32 0.0, %v1294
      %v1296 = vpop.f32.mrb[0].mxu0
      %1297 = vmatprep.mubr.bf16.mxu0 %v1236
      %1298 = vmatmul.mubr.bf16.gmra.mrb[0].mxu0 %v1235
      %v1299 = vpop.f32.mrb[0].mxu0
      %v1300 = vadd.f32 0.0, %v1299
      %v1301 = vpop.f32.mrb[0].mxu0
      %v1302 = vpop.f32.mrb[0].mxu0
      %v1303 = vadd.f32 0.0, %v1302
      %v1304 = vpop.f32.mrb[0].mxu0
      %1305 = vmatprep.mubr.bf16.mxu0 %v1238
      %1306 = vmatmul.mubr.bf16.gmra.mrb[0].mxu0 %v1237
      %v1307 = vpop.f32.mrb[0].mxu0
      %v1308 = vadd.f32 0.0, %v1307
      %v1309 = vpop.f32.mrb[0].mxu0
      %v1310 = vpop.f32.mrb[0].mxu0
      %v1311 = vadd.f32 0.0, %v1310
      %v1312 = vpop.f32.mrb[0].mxu0
      %1313 = vmatprep.mubr.bf16.mxu0 %v1240
      %1314 = vmatmul.mubr.bf16.gmra.mrb[0].mxu0 %v1239
      %v1315 = vpop.f32.mrb[0].mxu0
      %v1316 = vadd.f32 0.0, %v1315
      %v1317 = vpop.f32.mrb[0].mxu0
      %v1318 = vpop.f32.mrb[0].mxu0
      %v1319 = vpop.f32.mrb[0].mxu0
      %1320 = vdwg.mxu0
      %v1321 = vpack.c.bf16 %v1295, %v1292
      %v1322 = vpack.c.bf16 %v1303, %v1300
      %v1323 = vpack.c.bf16 %v1311, %v1308
      %v1324 = vpack.c.bf16 %v1316, %v1316
      %v1329 = vunpack.c.l.b16 %v1321
      %v1330 = vunpack.c.h.b16 %v1321
      %v1331 = vunpack.c.l.b16 %v1322
      %v1332 = vunpack.c.h.b16 %v1322
      %v1333 = vunpack.c.l.b16 %v1323
      %v1334 = vunpack.c.h.b16 %v1323
      %v1335 = vunpack.c.l.b16 %v1324
      %v1336 = vpack.c.b16 %v1329, %v1329
      %v1337 = vpack.c.b16 %v1330, %v1330
      %v1338 = vpack.c.b16 %v1331, %v1331
      %v1339 = vpack.c.b16 %v1332, %v1332
      %v1340 = vpack.c.b16 %v1333, %v1333
      %v1341 = vpack.c.b16 %v1334, %v1334
      %v1342 = vpack.c.b16 %v1335, %v1335
      %s1350 = smul.addr %s921, 4
      %s1351 = scalar_lea.vmem %s265, %s1350
      %1352 = vst [vmem:[%s1351] sm:$0xf] %v1336
      %1353 = vst [vmem:[%s1351 + $0x4] sm:$0xf] %v1337
      %1354 = vst [vmem:[%s1351 + $0x8] sm:$0xf] %v1338
      %1355 = vst [vmem:[%s1351 + $0xc] sm:$0xf] %v1339
      %1356 = vst [vmem:[%s1351 + $0x10] sm:$0xf] %v1340
      %1357 = vst [vmem:[%s1351 + $0x14] sm:$0xf] %v1341
      %1358 = vst [vmem:[%s1351 + $0x18] sm:$0xf] %v1342
      %p1359 = scmp.lt.s32.totalorder %s19, 7
      %s1360 = scalar_select %p1359, %s19, 7
      %s1361 = smul.addr %s1360, 32
      %s1362 = smul.addr %s1361, 4
      %s1363 = scalar_lea.vmem %s4, %s1362
      // Predicated region
      $region45: #{run.1} parent=35 // pred_check
        %p1364 = pneg %p146
      $region46: #{run.1} parent=35 // pred_check_branch
        %1366 = sbr.rel (%p1364) target = $region48
      $region47: #{run.1} parent=35 // pred_region
        _
      $region48: #{run.1} parent=35 // pred_fallthru
        _
    $region36: #{run.1} parent=5 // pred_fallthru
      _
    %p1367 = scmp.le.s32.totalorder 2, %s10
    // Predicated region
    $region49: #{run.1} parent=5 // pred_check
      %p1368 = pneg %p1367
    $region50: #{run.1} parent=5 // pred_check_branch
      %1370 = sbr.rel (%p1368) target = $region52
    $region51: #{run.1} parent=5 // pred_region
      %s1371 = ssub.s32 %s10, 2
      // Predicated region
      $region53: #{run.1} parent=51 // pred_check
        %p1372 = pneg %p152
      $region54: #{run.1} parent=51 // pred_check_branch
        %1374 = sbr.rel (%p1372) target = $region56
      $region55: #{run.1} parent=51 // pred_region
        %p1375 = scmp.lt.s32.totalorder %s21, 7
        %s1376 = scalar_select %p1375, %s21, 7
        %s1377 = smul.addr %s1376, 32
        %s1378 = smul.addr %s1377, 4
        %s1379 = scalar_lea.vmem %s4, %s1378
      $region56: #{run.1} parent=51 // pred_fallthru
        _
    $region52: #{run.1} parent=5 // pred_fallthru
      _
  $region6: #{run.1} parent=0 // loop_footer
    %s14 = sadd.s32 1, %s10
  $region7: #{run.1} parent=0 // loop_footer_branch
    %9 = sbr.rel target = $region3
  $region8: #{run.1} parent=0 // loop_exit
    _

</llo_original>
